<compile_context>
chip_gen: v7x
topology: tpu7x:2x2x1
jax: 0.10.0
libtpu: 0.0.40
codegen_flags: <defaults>
</compile_context>

<pallas_src>
import functools

import jax
import jax.numpy as jnp
from jax import lax
from jax.experimental import pallas as pl
from jax.experimental.pallas import tpu as pltpu


def _lstm_embedding_kernel(idx_ref, wfused_ref, whh_ref, bg_ref, blin_ref,
                           wlin_hbm, out_ref, wlin_vmem, wlin_sem, *,
                           Bp, T, H):
    """idx_ref:    (T*Bp, 1) int32, time-major (row t*Bp + b <-> idx[b, t])
       wfused_ref: (V, 4H)   bf16  (= emb @ w_ih.T, i/f/o cols pre-scaled 0.5)
       whh_ref:    (H, 4H)   f32   (= w_hh.T, i/f/o cols pre-scaled 0.5)
       bg_ref:     (1, 4H)   f32   (= b_ih + b_hh, i/f/o cols pre-scaled 0.5)
       blin_ref:   (1, OUT)  f32
       wlin_hbm:   (T*H,OUT) bf16  (memory_space=ANY; DMA'd in-kernel)
       out_ref:    (Bp, OUT) f32
       wlin_vmem:  (T*H,OUT) bf16  VMEM scratch
       wlin_sem:   DMA semaphore (1,)
    """
    # Kick off the final-Linear weight DMA now; it is only needed after the
    # recurrence, so the transfer hides completely behind it.
    wlin_cp = pltpu.make_async_copy(wlin_hbm, wlin_vmem, wlin_sem.at[0])
    wlin_cp.start()

    TB = Bp * T
    V = wfused_ref.shape[0]

    # ---------- fused embedding gather + input projection (one MXU matmul) --
    ids = idx_ref[...]                                          # (T*Bp, 1)
    lane_iota = lax.broadcasted_iota(jnp.int32, (TB, V), 1)
    onehot = (lane_iota == ids).astype(jnp.bfloat16)            # (T*Bp, V)
    gates_x = (jnp.dot(onehot, wfused_ref[...],
                       preferred_element_type=jnp.float32)
               + bg_ref[...])                                   # (T*Bp, 4H)

    whh = whh_ref[...]                                          # (H, 4H) f32

    # ---------- recurrence (T small & static -> unrolled) ----------
    h = jnp.zeros((Bp, H), jnp.float32)
    c = jnp.zeros((Bp, H), jnp.float32)
    h_list = []
    for t in range(T):
        gates = (gates_x[t * Bp:(t + 1) * Bp, :]
                 + jnp.dot(h, whh, preferred_element_type=jnp.float32))
        tnh = jnp.tanh(gates)            # single EUP pass over all 4 gates
        i_g = 0.5 * tnh[:, 0 * H:1 * H] + 0.5   # sigmoid(x) = 0.5*tanh(x/2)+0.5
        f_g = 0.5 * tnh[:, 1 * H:2 * H] + 0.5
        g_g = tnh[:, 2 * H:3 * H]               # g column was NOT pre-scaled
        o_g = 0.5 * tnh[:, 3 * H:4 * H] + 0.5
        c = f_g * c + i_g * g_g
        h = o_g * jnp.tanh(c)
        h_list.append(h)

    # Lane-concat hidden states -> one post-loop Linear matmul.
    h_all = jnp.concatenate(h_list, axis=1).astype(jnp.bfloat16)  # (Bp, T*H)

    wlin_cp.wait()
    logits = (jnp.dot(h_all, wlin_vmem[...],
                      preferred_element_type=jnp.float32)
              + blin_ref[...])                                  # (Bp, OUT)

    # relu(flat) in the reference module is computed then discarded -> omitted.
    # output / clamp(||output||_2, min=1)  ==  output * min(rsqrt(ss), 1)
    ss = jnp.sum(logits * logits, axis=-1, keepdims=True)
    inv = jnp.minimum(lax.rsqrt(ss), 1.0)
    out_ref[...] = logits * inv


def lstm_embedding_forward(idx, emb_table, w_ih_t, w_hh_t, b_gates,
                           w_lin_t, b_lin):
    B, T = idx.shape
    H = w_hh_t.shape[0]
    OUT = w_lin_t.shape[1]

    # Pad batch to a full sublane group (multiple of 8).
    Bp = ((max(B, 8) + 7) // 8) * 8
    idx_p = jnp.zeros((Bp, T), jnp.int32).at[:B, :].set(idx.astype(jnp.int32))
    # time-major flatten: row t*Bp + b  <->  token idx[b, t]
    idx_tm = idx_p.T.reshape(T * Bp, 1)

    # tanh-only sigmoid trick: pre-scale i/f/o gate columns (PyTorch gate
    # order i, f, g, o) of the fused table, w_hh^T and bias by 0.5.
    gate_scale = jnp.concatenate(
        [jnp.full((1, H), 0.5, jnp.float32),
         jnp.full((1, H), 0.5, jnp.float32),
         jnp.ones((1, H), jnp.float32),
         jnp.full((1, H), 0.5, jnp.float32)], axis=1)            # (1, 4H)

    # Fuse embedding + input projection into one (V, 4H) table (bf16 MXU path).
    w_fused = (jnp.dot(emb_table, w_ih_t) * gate_scale).astype(jnp.bfloat16)
    whh_s = (w_hh_t * gate_scale).astype(jnp.float32)
    bg_s = (b_gates * gate_scale).astype(jnp.float32)
    w_lin_bf = w_lin_t.astype(jnp.bfloat16)

    vmem = pl.BlockSpec(memory_space=pltpu.MemorySpace.VMEM)
    kernel = functools.partial(_lstm_embedding_kernel, Bp=Bp, T=T, H=H)

    out_p = pl.pallas_call(
        kernel,
        out_shape=jax.ShapeDtypeStruct((Bp, OUT), jnp.float32),
        in_specs=[vmem, vmem, vmem, vmem, vmem,
                  pl.BlockSpec(memory_space=pl.ANY)],   # wlin stays in HBM
        out_specs=vmem,
        scratch_shapes=[pltpu.VMEM((T * H, OUT), jnp.bfloat16),
                        pltpu.SemaphoreType.DMA((1,))],
    )(idx_tm, w_fused, whh_s, bg_s, b_lin, w_lin_bf)

    return out_p[:B]


def _reference(idx, emb_table, w_ih_t, w_hh_t, b_gates, w_lin_t, b_lin):
    """Pure-JAX f32 reference mirroring the PyTorch module's forward."""
    x = emb_table[idx]                          # (B, T, E)
    B, T, _ = x.shape
    H = w_hh_t.shape[0]
    h = jnp.zeros((B, H), jnp.float32)
    c = jnp.zeros((B, H), jnp.float32)
    hs = []
    for t in range(T):
        g = x[:, t, :] @ w_ih_t + h @ w_hh_t + b_gates
        i = jax.nn.sigmoid(g[:, 0 * H:1 * H])
        f = jax.nn.sigmoid(g[:, 1 * H:2 * H])
        gg = jnp.tanh(g[:, 2 * H:3 * H])
        o = jax.nn.sigmoid(g[:, 3 * H:4 * H])
        c = f * c + i * gg
        h = o * jnp.tanh(c)
        hs.append(h)
    flat = jnp.concatenate(hs, axis=1)          # (B, T*H)
    out = flat @ w_lin_t + b_lin
    n = jnp.sqrt(jnp.sum(out * out, axis=-1, keepdims=True))
    return out / jnp.maximum(n, 1.0)


if __name__ == "__main__":
    # module-consistent small shapes:
    #   batch B=2, seq_len T=8 (== input_size of the module),
    #   vocab V=256, embedding_dim E=256, hidden H=32, output OUT=128
    B, T = 2, 8
    V, E, H, OUT = 256, 256, 32, 128

    key = jax.random.PRNGKey(0)
    ks = jax.random.split(key, 8)

    idx = jax.random.randint(ks[0], (B, T), 0, V, dtype=jnp.int32)
    emb_table = jax.random.normal(ks[1], (V, E), jnp.float32) * 0.1

    s = 1.0 / jnp.sqrt(jnp.float32(H))
    w_ih_t = jax.random.uniform(ks[2], (E, 4 * H), jnp.float32, -s, s)
    w_hh_t = jax.random.uniform(ks[3], (H, 4 * H), jnp.float32, -s, s)
    b_ih = jax.random.uniform(ks[4], (1, 4 * H), jnp.float32, -s, s)
    b_hh = jax.random.uniform(ks[5], (1, 4 * H), jnp.float32, -s, s)
    b_gates = b_ih + b_hh

    sl = 1.0 / jnp.sqrt(jnp.float32(T * H))
    w_lin_t = jax.random.uniform(ks[6], (T * H, OUT), jnp.float32, -sl, sl)
    b_lin = jax.random.uniform(ks[7], (1, OUT), jnp.float32, -sl, sl)

    out = lstm_embedding_forward(idx, emb_table, w_ih_t, w_hh_t, b_gates,
                                 w_lin_t, b_lin)
    jax.block_until_ready(out)

    assert out.shape == (B, OUT)
    assert bool(jnp.all(jnp.isfinite(out)))

    # Loose tolerance: kernel uses bf16 MXU operands for the big matmuls.
    ref = _reference(idx, emb_table, w_ih_t, w_hh_t, b_gates, w_lin_t, b_lin)
    max_err = float(jnp.max(jnp.abs(out - ref)))
    assert max_err < 5e-2, f"max abs error vs reference: {max_err}"

    print("KERNEL_OK")
</pallas_src>

<mosaic_0001>
module attributes {stable_mosaic.version = 11 : i64} {
  func.func @_lstm_embedding_kernel(%arg0: memref<64x1xi32, #tpu.memory_space<vmem>>, %arg1: memref<256x128xbf16, #tpu.memory_space<vmem>>, %arg2: memref<32x128xf32, #tpu.memory_space<vmem>>, %arg3: memref<1x128xf32, #tpu.memory_space<vmem>>, %arg4: memref<1x128xf32, #tpu.memory_space<vmem>>, %arg5: memref<256x128xbf16, #tpu.memory_space<any>>, %arg6: memref<8x128xf32, #tpu.memory_space<vmem>>, %arg7: memref<256x128xbf16, #tpu.memory_space<vmem>>, %arg8: memref<1x!tpu.dma_semaphore, #tpu.memory_space<semaphore_mem>>) attributes {dimension_semantics = [], scalar_prefetch = 0 : i64, scratch_operands = 2 : i64, tpu.core_type = #tpu.core_type<tc>} {
    %c0_i32 = arith.constant 0 : i32
    %0 = tpu.memref_slice %arg8[%c0_i32] : memref<1x!tpu.dma_semaphore, #tpu.memory_space<semaphore_mem>> -> memref<1x!tpu.dma_semaphore, #tpu.memory_space<semaphore_mem>>
    %1 = tpu.memref_squeeze %0 : memref<1x!tpu.dma_semaphore, #tpu.memory_space<semaphore_mem>> -> memref<!tpu.dma_semaphore, #tpu.memory_space<semaphore_mem>>
    tpu.enqueue_dma source(%arg5 : memref<256x128xbf16, #tpu.memory_space<any>>) target(%arg7 : memref<256x128xbf16, #tpu.memory_space<vmem>>) target_semaphore(%1 : memref<!tpu.dma_semaphore, #tpu.memory_space<semaphore_mem>>)
    %c0 = arith.constant 0 : index
    %c0_0 = arith.constant 0 : index
    %2 = vector.load %arg0[%c0, %c0_0] : memref<64x1xi32, #tpu.memory_space<vmem>>, vector<64x1xi32>
    %3 = tpu.iota {dimensions = array<i32: 1>} : vector<64x256xi32>
    %4 = vector.broadcast %2 : vector<64x1xi32> to vector<64x256xi32>
    %5 = arith.cmpi eq, %3, %4 : vector<64x256xi32>
    %6 = arith.extui %5 : vector<64x256xi1> to vector<64x256xi32>
    %7 = arith.sitofp %6 : vector<64x256xi32> to vector<64x256xf32>
    %8 = arith.truncf %7 : vector<64x256xf32> to vector<64x256xbf16>
    %c0_1 = arith.constant 0 : index
    %c0_2 = arith.constant 0 : index
    %9 = vector.load %arg1[%c0_1, %c0_2] : memref<256x128xbf16, #tpu.memory_space<vmem>>, vector<256x128xbf16>
    %cst = arith.constant dense<0.000000e+00> : vector<64x128xf32>
    %10 = tpu.matmul %8, %9, %cst {dimension_numbers = #tpu.dot_dimension_numbers<[1], [0], [0], [1], [0, 0, 1, 1], [], []>} : vector<64x256xbf16>, vector<256x128xbf16>, vector<64x128xf32> -> vector<64x128xf32>
    %c0_3 = arith.constant 0 : index
    %c0_4 = arith.constant 0 : index
    %11 = vector.load %arg3[%c0_3, %c0_4] : memref<1x128xf32, #tpu.memory_space<vmem>>, vector<1x128xf32>
    %12 = vector.broadcast %11 : vector<1x128xf32> to vector<64x128xf32>
    %13 = arith.addf %10, %12 : vector<64x128xf32>
    %c0_5 = arith.constant 0 : index
    %c0_6 = arith.constant 0 : index
    %14 = vector.load %arg2[%c0_5, %c0_6] : memref<32x128xf32, #tpu.memory_space<vmem>>, vector<32x128xf32>
    %cst_7 = arith.constant 0.000000e+00 : f32
    %15 = vector.broadcast %cst_7 : f32 to vector<8x32xf32>
    %cst_8 = arith.constant 0.000000e+00 : f32
    %16 = vector.broadcast %cst_8 : f32 to vector<8x32xf32>
    %17 = vector.extract_strided_slice %13 {offsets = [0, 0], sizes = [8, 128], strides = [1, 1]} : vector<64x128xf32> to vector<8x128xf32>
    %cst_9 = arith.constant dense<0.000000e+00> : vector<8x128xf32>
    %18 = tpu.matmul %15, %14, %cst_9 {dimension_numbers = #tpu.dot_dimension_numbers<[1], [0], [0], [1], [0, 0, 1, 1], [], []>} : vector<8x32xf32>, vector<32x128xf32>, vector<8x128xf32> -> vector<8x128xf32>
    %19 = arith.addf %17, %18 : vector<8x128xf32>
    %20 = math.tanh %19 : vector<8x128xf32>
    %21 = vector.extract_strided_slice %20 {offsets = [0, 0], sizes = [8, 32], strides = [1, 1]} : vector<8x128xf32> to vector<8x32xf32>
    %cst_10 = arith.constant 5.000000e-01 : f32
    %22 = vector.broadcast %cst_10 : f32 to vector<8x32xf32>
    %23 = arith.mulf %22, %21 : vector<8x32xf32>
    %cst_11 = arith.constant 5.000000e-01 : f32
    %24 = vector.broadcast %cst_11 : f32 to vector<8x32xf32>
    %25 = arith.addf %23, %24 : vector<8x32xf32>
    %26 = vector.extract_strided_slice %20 {offsets = [0, 32], sizes = [8, 32], strides = [1, 1]} : vector<8x128xf32> to vector<8x32xf32>
    %cst_12 = arith.constant 5.000000e-01 : f32
    %27 = vector.broadcast %cst_12 : f32 to vector<8x32xf32>
    %28 = arith.mulf %27, %26 : vector<8x32xf32>
    %cst_13 = arith.constant 5.000000e-01 : f32
    %29 = vector.broadcast %cst_13 : f32 to vector<8x32xf32>
    %30 = arith.addf %28, %29 : vector<8x32xf32>
    %31 = vector.extract_strided_slice %20 {offsets = [0, 64], sizes = [8, 32], strides = [1, 1]} : vector<8x128xf32> to vector<8x32xf32>
    %32 = vector.extract_strided_slice %20 {offsets = [0, 96], sizes = [8, 32], strides = [1, 1]} : vector<8x128xf32> to vector<8x32xf32>
    %cst_14 = arith.constant 5.000000e-01 : f32
    %33 = vector.broadcast %cst_14 : f32 to vector<8x32xf32>
    %34 = arith.mulf %33, %32 : vector<8x32xf32>
    %cst_15 = arith.constant 5.000000e-01 : f32
    %35 = vector.broadcast %cst_15 : f32 to vector<8x32xf32>
    %36 = arith.addf %34, %35 : vector<8x32xf32>
    %37 = arith.mulf %30, %16 : vector<8x32xf32>
    %38 = arith.mulf %25, %31 : vector<8x32xf32>
    %39 = arith.addf %37, %38 : vector<8x32xf32>
    %40 = math.tanh %39 : vector<8x32xf32>
    %41 = arith.mulf %36, %40 : vector<8x32xf32>
    %42 = vector.extract_strided_slice %13 {offsets = [8, 0], sizes = [8, 128], strides = [1, 1]} : vector<64x128xf32> to vector<8x128xf32>
    %cst_16 = arith.constant dense<0.000000e+00> : vector<8x128xf32>
    %43 = tpu.matmul %41, %14, %cst_16 {dimension_numbers = #tpu.dot_dimension_numbers<[1], [0], [0], [1], [0, 0, 1, 1], [], []>} : vector<8x32xf32>, vector<32x128xf32>, vector<8x128xf32> -> vector<8x128xf32>
    %44 = arith.addf %42, %43 : vector<8x128xf32>
    %45 = math.tanh %44 : vector<8x128xf32>
    %46 = vector.extract_strided_slice %45 {offsets = [0, 0], sizes = [8, 32], strides = [1, 1]} : vector<8x128xf32> to vector<8x32xf32>
    %cst_17 = arith.constant 5.000000e-01 : f32
    %47 = vector.broadcast %cst_17 : f32 to vector<8x32xf32>
    %48 = arith.mulf %47, %46 : vector<8x32xf32>
    %cst_18 = arith.constant 5.000000e-01 : f32
    %49 = vector.broadcast %cst_18 : f32 to vector<8x32xf32>
    %50 = arith.addf %48, %49 : vector<8x32xf32>
    %51 = vector.extract_strided_slice %45 {offsets = [0, 32], sizes = [8, 32], strides = [1, 1]} : vector<8x128xf32> to vector<8x32xf32>
    %cst_19 = arith.constant 5.000000e-01 : f32
    %52 = vector.broadcast %cst_19 : f32 to vector<8x32xf32>
    %53 = arith.mulf %52, %51 : vector<8x32xf32>
    %cst_20 = arith.constant 5.000000e-01 : f32
    %54 = vector.broadcast %cst_20 : f32 to vector<8x32xf32>
    %55 = arith.addf %53, %54 : vector<8x32xf32>
    %56 = vector.extract_strided_slice %45 {offsets = [0, 64], sizes = [8, 32], strides = [1, 1]} : vector<8x128xf32> to vector<8x32xf32>
    %57 = vector.extract_strided_slice %45 {offsets = [0, 96], sizes = [8, 32], strides = [1, 1]} : vector<8x128xf32> to vector<8x32xf32>
    %cst_21 = arith.constant 5.000000e-01 : f32
    %58 = vector.broadcast %cst_21 : f32 to vector<8x32xf32>
    %59 = arith.mulf %58, %57 : vector<8x32xf32>
    %cst_22 = arith.constant 5.000000e-01 : f32
    %60 = vector.broadcast %cst_22 : f32 to vector<8x32xf32>
    %61 = arith.addf %59, %60 : vector<8x32xf32>
    %62 = arith.mulf %55, %39 : vector<8x32xf32>
    %63 = arith.mulf %50, %56 : vector<8x32xf32>
    %64 = arith.addf %62, %63 : vector<8x32xf32>
    %65 = math.tanh %64 : vector<8x32xf32>
    %66 = arith.mulf %61, %65 : vector<8x32xf32>
    %67 = vector.extract_strided_slice %13 {offsets = [16, 0], sizes = [8, 128], strides = [1, 1]} : vector<64x128xf32> to vector<8x128xf32>
    %cst_23 = arith.constant dense<0.000000e+00> : vector<8x128xf32>
    %68 = tpu.matmul %66, %14, %cst_23 {dimension_numbers = #tpu.dot_dimension_numbers<[1], [0], [0], [1], [0, 0, 1, 1], [], []>} : vector<8x32xf32>, vector<32x128xf32>, vector<8x128xf32> -> vector<8x128xf32>
    %69 = arith.addf %67, %68 : vector<8x128xf32>
    %70 = math.tanh %69 : vector<8x128xf32>
    %71 = vector.extract_strided_slice %70 {offsets = [0, 0], sizes = [8, 32], strides = [1, 1]} : vector<8x128xf32> to vector<8x32xf32>
    %cst_24 = arith.constant 5.000000e-01 : f32
    %72 = vector.broadcast %cst_24 : f32 to vector<8x32xf32>
    %73 = arith.mulf %72, %71 : vector<8x32xf32>
    %cst_25 = arith.constant 5.000000e-01 : f32
    %74 = vector.broadcast %cst_25 : f32 to vector<8x32xf32>
    %75 = arith.addf %73, %74 : vector<8x32xf32>
    %76 = vector.extract_strided_slice %70 {offsets = [0, 32], sizes = [8, 32], strides = [1, 1]} : vector<8x128xf32> to vector<8x32xf32>
    %cst_26 = arith.constant 5.000000e-01 : f32
    %77 = vector.broadcast %cst_26 : f32 to vector<8x32xf32>
    %78 = arith.mulf %77, %76 : vector<8x32xf32>
    %cst_27 = arith.constant 5.000000e-01 : f32
    %79 = vector.broadcast %cst_27 : f32 to vector<8x32xf32>
    %80 = arith.addf %78, %79 : vector<8x32xf32>
    %81 = vector.extract_strided_slice %70 {offsets = [0, 64], sizes = [8, 32], strides = [1, 1]} : vector<8x128xf32> to vector<8x32xf32>
    %82 = vector.extract_strided_slice %70 {offsets = [0, 96], sizes = [8, 32], strides = [1, 1]} : vector<8x128xf32> to vector<8x32xf32>
    %cst_28 = arith.constant 5.000000e-01 : f32
    %83 = vector.broadcast %cst_28 : f32 to vector<8x32xf32>
    %84 = arith.mulf %83, %82 : vector<8x32xf32>
    %cst_29 = arith.constant 5.000000e-01 : f32
    %85 = vector.broadcast %cst_29 : f32 to vector<8x32xf32>
    %86 = arith.addf %84, %85 : vector<8x32xf32>
    %87 = arith.mulf %80, %64 : vector<8x32xf32>
    %88 = arith.mulf %75, %81 : vector<8x32xf32>
    %89 = arith.addf %87, %88 : vector<8x32xf32>
    %90 = math.tanh %89 : vector<8x32xf32>
    %91 = arith.mulf %86, %90 : vector<8x32xf32>
    %92 = vector.extract_strided_slice %13 {offsets = [24, 0], sizes = [8, 128], strides = [1, 1]} : vector<64x128xf32> to vector<8x128xf32>
    %cst_30 = arith.constant dense<0.000000e+00> : vector<8x128xf32>
    %93 = tpu.matmul %91, %14, %cst_30 {dimension_numbers = #tpu.dot_dimension_numbers<[1], [0], [0], [1], [0, 0, 1, 1], [], []>} : vector<8x32xf32>, vector<32x128xf32>, vector<8x128xf32> -> vector<8x128xf32>
    %94 = arith.addf %92, %93 : vector<8x128xf32>
    %95 = math.tanh %94 : vector<8x128xf32>
    %96 = vector.extract_strided_slice %95 {offsets = [0, 0], sizes = [8, 32], strides = [1, 1]} : vector<8x128xf32> to vector<8x32xf32>
    %cst_31 = arith.constant 5.000000e-01 : f32
    %97 = vector.broadcast %cst_31 : f32 to vector<8x32xf32>
    %98 = arith.mulf %97, %96 : vector<8x32xf32>
    %cst_32 = arith.constant 5.000000e-01 : f32
    %99 = vector.broadcast %cst_32 : f32 to vector<8x32xf32>
    %100 = arith.addf %98, %99 : vector<8x32xf32>
    %101 = vector.extract_strided_slice %95 {offsets = [0, 32], sizes = [8, 32], strides = [1, 1]} : vector<8x128xf32> to vector<8x32xf32>
    %cst_33 = arith.constant 5.000000e-01 : f32
    %102 = vector.broadcast %cst_33 : f32 to vector<8x32xf32>
    %103 = arith.mulf %102, %101 : vector<8x32xf32>
    %cst_34 = arith.constant 5.000000e-01 : f32
    %104 = vector.broadcast %cst_34 : f32 to vector<8x32xf32>
    %105 = arith.addf %103, %104 : vector<8x32xf32>
    %106 = vector.extract_strided_slice %95 {offsets = [0, 64], sizes = [8, 32], strides = [1, 1]} : vector<8x128xf32> to vector<8x32xf32>
    %107 = vector.extract_strided_slice %95 {offsets = [0, 96], sizes = [8, 32], strides = [1, 1]} : vector<8x128xf32> to vector<8x32xf32>
    %cst_35 = arith.constant 5.000000e-01 : f32
    %108 = vector.broadcast %cst_35 : f32 to vector<8x32xf32>
    %109 = arith.mulf %108, %107 : vector<8x32xf32>
    %cst_36 = arith.constant 5.000000e-01 : f32
    %110 = vector.broadcast %cst_36 : f32 to vector<8x32xf32>
    %111 = arith.addf %109, %110 : vector<8x32xf32>
    %112 = arith.mulf %105, %89 : vector<8x32xf32>
    %113 = arith.mulf %100, %106 : vector<8x32xf32>
    %114 = arith.addf %112, %113 : vector<8x32xf32>
    %115 = math.tanh %114 : vector<8x32xf32>
    %116 = arith.mulf %111, %115 : vector<8x32xf32>
    %117 = vector.extract_strided_slice %13 {offsets = [32, 0], sizes = [8, 128], strides = [1, 1]} : vector<64x128xf32> to vector<8x128xf32>
    %cst_37 = arith.constant dense<0.000000e+00> : vector<8x128xf32>
    %118 = tpu.matmul %116, %14, %cst_37 {dimension_numbers = #tpu.dot_dimension_numbers<[1], [0], [0], [1], [0, 0, 1, 1], [], []>} : vector<8x32xf32>, vector<32x128xf32>, vector<8x128xf32> -> vector<8x128xf32>
    %119 = arith.addf %117, %118 : vector<8x128xf32>
    %120 = math.tanh %119 : vector<8x128xf32>
    %121 = vector.extract_strided_slice %120 {offsets = [0, 0], sizes = [8, 32], strides = [1, 1]} : vector<8x128xf32> to vector<8x32xf32>
    %cst_38 = arith.constant 5.000000e-01 : f32
    %122 = vector.broadcast %cst_38 : f32 to vector<8x32xf32>
    %123 = arith.mulf %122, %121 : vector<8x32xf32>
    %cst_39 = arith.constant 5.000000e-01 : f32
    %124 = vector.broadcast %cst_39 : f32 to vector<8x32xf32>
    %125 = arith.addf %123, %124 : vector<8x32xf32>
    %126 = vector.extract_strided_slice %120 {offsets = [0, 32], sizes = [8, 32], strides = [1, 1]} : vector<8x128xf32> to vector<8x32xf32>
    %cst_40 = arith.constant 5.000000e-01 : f32
    %127 = vector.broadcast %cst_40 : f32 to vector<8x32xf32>
    %128 = arith.mulf %127, %126 : vector<8x32xf32>
    %cst_41 = arith.constant 5.000000e-01 : f32
    %129 = vector.broadcast %cst_41 : f32 to vector<8x32xf32>
    %130 = arith.addf %128, %129 : vector<8x32xf32>
    %131 = vector.extract_strided_slice %120 {offsets = [0, 64], sizes = [8, 32], strides = [1, 1]} : vector<8x128xf32> to vector<8x32xf32>
    %132 = vector.extract_strided_slice %120 {offsets = [0, 96], sizes = [8, 32], strides = [1, 1]} : vector<8x128xf32> to vector<8x32xf32>
    %cst_42 = arith.constant 5.000000e-01 : f32
    %133 = vector.broadcast %cst_42 : f32 to vector<8x32xf32>
    %134 = arith.mulf %133, %132 : vector<8x32xf32>
    %cst_43 = arith.constant 5.000000e-01 : f32
    %135 = vector.broadcast %cst_43 : f32 to vector<8x32xf32>
    %136 = arith.addf %134, %135 : vector<8x32xf32>
    %137 = arith.mulf %130, %114 : vector<8x32xf32>
    %138 = arith.mulf %125, %131 : vector<8x32xf32>
    %139 = arith.addf %137, %138 : vector<8x32xf32>
    %140 = math.tanh %139 : vector<8x32xf32>
    %141 = arith.mulf %136, %140 : vector<8x32xf32>
    %142 = vector.extract_strided_slice %13 {offsets = [40, 0], sizes = [8, 128], strides = [1, 1]} : vector<64x128xf32> to vector<8x128xf32>
    %cst_44 = arith.constant dense<0.000000e+00> : vector<8x128xf32>
    %143 = tpu.matmul %141, %14, %cst_44 {dimension_numbers = #tpu.dot_dimension_numbers<[1], [0], [0], [1], [0, 0, 1, 1], [], []>} : vector<8x32xf32>, vector<32x128xf32>, vector<8x128xf32> -> vector<8x128xf32>
    %144 = arith.addf %142, %143 : vector<8x128xf32>
    %145 = math.tanh %144 : vector<8x128xf32>
    %146 = vector.extract_strided_slice %145 {offsets = [0, 0], sizes = [8, 32], strides = [1, 1]} : vector<8x128xf32> to vector<8x32xf32>
    %cst_45 = arith.constant 5.000000e-01 : f32
    %147 = vector.broadcast %cst_45 : f32 to vector<8x32xf32>
    %148 = arith.mulf %147, %146 : vector<8x32xf32>
    %cst_46 = arith.constant 5.000000e-01 : f32
    %149 = vector.broadcast %cst_46 : f32 to vector<8x32xf32>
    %150 = arith.addf %148, %149 : vector<8x32xf32>
    %151 = vector.extract_strided_slice %145 {offsets = [0, 32], sizes = [8, 32], strides = [1, 1]} : vector<8x128xf32> to vector<8x32xf32>
    %cst_47 = arith.constant 5.000000e-01 : f32
    %152 = vector.broadcast %cst_47 : f32 to vector<8x32xf32>
    %153 = arith.mulf %152, %151 : vector<8x32xf32>
    %cst_48 = arith.constant 5.000000e-01 : f32
    %154 = vector.broadcast %cst_48 : f32 to vector<8x32xf32>
    %155 = arith.addf %153, %154 : vector<8x32xf32>
    %156 = vector.extract_strided_slice %145 {offsets = [0, 64], sizes = [8, 32], strides = [1, 1]} : vector<8x128xf32> to vector<8x32xf32>
    %157 = vector.extract_strided_slice %145 {offsets = [0, 96], sizes = [8, 32], strides = [1, 1]} : vector<8x128xf32> to vector<8x32xf32>
    %cst_49 = arith.constant 5.000000e-01 : f32
    %158 = vector.broadcast %cst_49 : f32 to vector<8x32xf32>
    %159 = arith.mulf %158, %157 : vector<8x32xf32>
    %cst_50 = arith.constant 5.000000e-01 : f32
    %160 = vector.broadcast %cst_50 : f32 to vector<8x32xf32>
    %161 = arith.addf %159, %160 : vector<8x32xf32>
    %162 = arith.mulf %155, %139 : vector<8x32xf32>
    %163 = arith.mulf %150, %156 : vector<8x32xf32>
    %164 = arith.addf %162, %163 : vector<8x32xf32>
    %165 = math.tanh %164 : vector<8x32xf32>
    %166 = arith.mulf %161, %165 : vector<8x32xf32>
    %167 = vector.extract_strided_slice %13 {offsets = [48, 0], sizes = [8, 128], strides = [1, 1]} : vector<64x128xf32> to vector<8x128xf32>
    %cst_51 = arith.constant dense<0.000000e+00> : vector<8x128xf32>
    %168 = tpu.matmul %166, %14, %cst_51 {dimension_numbers = #tpu.dot_dimension_numbers<[1], [0], [0], [1], [0, 0, 1, 1], [], []>} : vector<8x32xf32>, vector<32x128xf32>, vector<8x128xf32> -> vector<8x128xf32>
    %169 = arith.addf %167, %168 : vector<8x128xf32>
    %170 = math.tanh %169 : vector<8x128xf32>
    %171 = vector.extract_strided_slice %170 {offsets = [0, 0], sizes = [8, 32], strides = [1, 1]} : vector<8x128xf32> to vector<8x32xf32>
    %cst_52 = arith.constant 5.000000e-01 : f32
    %172 = vector.broadcast %cst_52 : f32 to vector<8x32xf32>
    %173 = arith.mulf %172, %171 : vector<8x32xf32>
    %cst_53 = arith.constant 5.000000e-01 : f32
    %174 = vector.broadcast %cst_53 : f32 to vector<8x32xf32>
    %175 = arith.addf %173, %174 : vector<8x32xf32>
    %176 = vector.extract_strided_slice %170 {offsets = [0, 32], sizes = [8, 32], strides = [1, 1]} : vector<8x128xf32> to vector<8x32xf32>
    %cst_54 = arith.constant 5.000000e-01 : f32
    %177 = vector.broadcast %cst_54 : f32 to vector<8x32xf32>
    %178 = arith.mulf %177, %176 : vector<8x32xf32>
    %cst_55 = arith.constant 5.000000e-01 : f32
    %179 = vector.broadcast %cst_55 : f32 to vector<8x32xf32>
    %180 = arith.addf %178, %179 : vector<8x32xf32>
    %181 = vector.extract_strided_slice %170 {offsets = [0, 64], sizes = [8, 32], strides = [1, 1]} : vector<8x128xf32> to vector<8x32xf32>
    %182 = vector.extract_strided_slice %170 {offsets = [0, 96], sizes = [8, 32], strides = [1, 1]} : vector<8x128xf32> to vector<8x32xf32>
    %cst_56 = arith.constant 5.000000e-01 : f32
    %183 = vector.broadcast %cst_56 : f32 to vector<8x32xf32>
    %184 = arith.mulf %183, %182 : vector<8x32xf32>
    %cst_57 = arith.constant 5.000000e-01 : f32
    %185 = vector.broadcast %cst_57 : f32 to vector<8x32xf32>
    %186 = arith.addf %184, %185 : vector<8x32xf32>
    %187 = arith.mulf %180, %164 : vector<8x32xf32>
    %188 = arith.mulf %175, %181 : vector<8x32xf32>
    %189 = arith.addf %187, %188 : vector<8x32xf32>
    %190 = math.tanh %189 : vector<8x32xf32>
    %191 = arith.mulf %186, %190 : vector<8x32xf32>
    %192 = vector.extract_strided_slice %13 {offsets = [56, 0], sizes = [8, 128], strides = [1, 1]} : vector<64x128xf32> to vector<8x128xf32>
    %cst_58 = arith.constant dense<0.000000e+00> : vector<8x128xf32>
    %193 = tpu.matmul %191, %14, %cst_58 {dimension_numbers = #tpu.dot_dimension_numbers<[1], [0], [0], [1], [0, 0, 1, 1], [], []>} : vector<8x32xf32>, vector<32x128xf32>, vector<8x128xf32> -> vector<8x128xf32>
    %194 = arith.addf %192, %193 : vector<8x128xf32>
    %195 = math.tanh %194 : vector<8x128xf32>
    %196 = vector.extract_strided_slice %195 {offsets = [0, 0], sizes = [8, 32], strides = [1, 1]} : vector<8x128xf32> to vector<8x32xf32>
    %cst_59 = arith.constant 5.000000e-01 : f32
    %197 = vector.broadcast %cst_59 : f32 to vector<8x32xf32>
    %198 = arith.mulf %197, %196 : vector<8x32xf32>
    %cst_60 = arith.constant 5.000000e-01 : f32
    %199 = vector.broadcast %cst_60 : f32 to vector<8x32xf32>
    %200 = arith.addf %198, %199 : vector<8x32xf32>
    %201 = vector.extract_strided_slice %195 {offsets = [0, 32], sizes = [8, 32], strides = [1, 1]} : vector<8x128xf32> to vector<8x32xf32>
    %cst_61 = arith.constant 5.000000e-01 : f32
    %202 = vector.broadcast %cst_61 : f32 to vector<8x32xf32>
    %203 = arith.mulf %202, %201 : vector<8x32xf32>
    %cst_62 = arith.constant 5.000000e-01 : f32
    %204 = vector.broadcast %cst_62 : f32 to vector<8x32xf32>
    %205 = arith.addf %203, %204 : vector<8x32xf32>
    %206 = vector.extract_strided_slice %195 {offsets = [0, 64], sizes = [8, 32], strides = [1, 1]} : vector<8x128xf32> to vector<8x32xf32>
    %207 = vector.extract_strided_slice %195 {offsets = [0, 96], sizes = [8, 32], strides = [1, 1]} : vector<8x128xf32> to vector<8x32xf32>
    %cst_63 = arith.constant 5.000000e-01 : f32
    %208 = vector.broadcast %cst_63 : f32 to vector<8x32xf32>
    %209 = arith.mulf %208, %207 : vector<8x32xf32>
    %cst_64 = arith.constant 5.000000e-01 : f32
    %210 = vector.broadcast %cst_64 : f32 to vector<8x32xf32>
    %211 = arith.addf %209, %210 : vector<8x32xf32>
    %212 = arith.mulf %205, %189 : vector<8x32xf32>
    %213 = arith.mulf %200, %206 : vector<8x32xf32>
    %214 = arith.addf %212, %213 : vector<8x32xf32>
    %215 = math.tanh %214 : vector<8x32xf32>
    %216 = arith.mulf %211, %215 : vector<8x32xf32>
    %217 = tpu.concatenate %41, %66, %91, %116, %141, %166, %191, %216 in 1 : vector<8x32xf32>, vector<8x32xf32>, vector<8x32xf32>, vector<8x32xf32>, vector<8x32xf32>, vector<8x32xf32>, vector<8x32xf32>, vector<8x32xf32> -> vector<8x256xf32>
    %218 = arith.truncf %217 : vector<8x256xf32> to vector<8x256xbf16>
    %c0_i32_65 = arith.constant 0 : i32
    %219 = tpu.memref_slice %arg8[%c0_i32_65] : memref<1x!tpu.dma_semaphore, #tpu.memory_space<semaphore_mem>> -> memref<1x!tpu.dma_semaphore, #tpu.memory_space<semaphore_mem>>
    %220 = tpu.memref_squeeze %219 : memref<1x!tpu.dma_semaphore, #tpu.memory_space<semaphore_mem>> -> memref<!tpu.dma_semaphore, #tpu.memory_space<semaphore_mem>>
    tpu.wait_dma2 semaphore(%220 : memref<!tpu.dma_semaphore, #tpu.memory_space<semaphore_mem>>) src(%arg5 : memref<256x128xbf16, #tpu.memory_space<any>>) dst(%arg7 : memref<256x128xbf16, #tpu.memory_space<vmem>>)
    %c0_66 = arith.constant 0 : index
    %c0_67 = arith.constant 0 : index
    %221 = vector.load %arg7[%c0_66, %c0_67] : memref<256x128xbf16, #tpu.memory_space<vmem>>, vector<256x128xbf16>
    %cst_68 = arith.constant dense<0.000000e+00> : vector<8x128xf32>
    %222 = tpu.matmul %218, %221, %cst_68 {dimension_numbers = #tpu.dot_dimension_numbers<[1], [0], [0], [1], [0, 0, 1, 1], [], []>} : vector<8x256xbf16>, vector<256x128xbf16>, vector<8x128xf32> -> vector<8x128xf32>
    %c0_69 = arith.constant 0 : index
    %c0_70 = arith.constant 0 : index
    %223 = vector.load %arg4[%c0_69, %c0_70] : memref<1x128xf32, #tpu.memory_space<vmem>>, vector<1x128xf32>
    %224 = vector.broadcast %223 : vector<1x128xf32> to vector<8x128xf32>
    %225 = arith.addf %222, %224 : vector<8x128xf32>
    %226 = arith.mulf %225, %225 : vector<8x128xf32>
    %cst_71 = arith.constant dense<0.000000e+00> : vector<8xf32>
    %227 = vector.multi_reduction <add>, %226, %cst_71 [1] : vector<8x128xf32> to vector<8xf32>
    %228 = vector.shape_cast %227 : vector<8xf32> to vector<8x1xf32>
    %229 = math.rsqrt %228 : vector<8x1xf32>
    %cst_72 = arith.constant 1.000000e+00 : f32
    %230 = vector.broadcast %cst_72 : f32 to vector<8x1xf32>
    %231 = arith.minimumf %229, %230 : vector<8x1xf32>
    %232 = vector.broadcast %231 : vector<8x1xf32> to vector<8x128xf32>
    %233 = arith.mulf %225, %232 : vector<8x128xf32>
    %c0_73 = arith.constant 0 : index
    %c0_74 = arith.constant 0 : index
    %234 = vector.load %arg6[%c0_73, %c0_74] : memref<8x128xf32, #tpu.memory_space<vmem>>, vector<8x128xf32>
    tpu.vector_store %arg6[%c0_73, %c0_74], %233 {strides = array<i32>} : memref<8x128xf32, #tpu.memory_space<vmem>>, vector<8x128xf32>,
    return
  }
}

</mosaic_0001>

<llo_original>
// kernel: tpu_custom_call.1
$region0: #{tpu_custom_call.1}
  #allocation0 [shape = 'u32[]', space=smem, size = 0x4, offset = 0x4, fixed_abs, tag = 'smem constant byte address 0x4 - core index']
  #allocation1 [shape = 'u32[144,128]{1,0:T(1,128)}', space=vmem, size = 0x12000, scoped, tag = 'internal scratch']
  #allocation2 [shape = 'bf16[256,128]{1,0:T(16,128)(2,1)}', space=vmem, size = 0x10000, scoped, tag = 'scratch operand']
  #allocation3 [shape = 's32[1]{0}', space=sflag, size = 0x4, scoped, tag = 'scratch operand']
  #allocation8 [shape = 's32[]', space=sflag, size = 0x4, offset = 0, fixed_abs, tag = 'sflag constant byte address 0x0 - dummy sync flag']
  #allocation9 [shape = 's32[]', space=sflag, size = 0x4, offset = 0, fixed_abs, tag = 'sflag constant byte address 0x0 - dummy sync flag']
  #allocation10 [shape = 'u32[]', space=smem, size = 0x4, offset = 0x44, fixed_abs, tag = 'smem constant byte address 0x44 - assertion arg 0']
  #allocation11 [shape = 'u32[]', space=smem, size = 0x4, offset = 0x48, fixed_abs, tag = 'smem constant byte address 0x48 - assertion arg 1']
  %s0 = inlined_call_operand.vmem [shape: s32[64,1], index: 0, kind: input, shape index: {}]
  %s1 = inlined_call_operand.hbm [shape: bf16[256,128], index: 1, kind: input, shape index: {}]
  %s2 = inlined_call_operand.vmem [shape: f32[32,128], index: 2, kind: input, shape index: {}]
  %s3 = inlined_call_operand.vmem [shape: f32[1,128], index: 3, kind: input, shape index: {}]
  %s4 = inlined_call_operand.vmem [shape: f32[1,128], index: 4, kind: input, shape index: {}]
  %s5 = inlined_call_operand.hbm [shape: bf16[256,128], index: 5, kind: input, shape index: {}]
  %s6 = inlined_call_operand.hbm [shape: f32[8,128], index: 6, kind: output, shape index: {}]
  %s7 = sld [smem:[#allocation0]]
  $region38: #{tpu_custom_call.1} parent=0
    _
  %s9 = ssub.s32 1, %s7
  %s10 = scalar_select 0, %s9, %s7
  $region1: #{tpu_custom_call.1} parent=0
    #allocation4 [shape = 'u8[65536]{0}', space=vmem, size = 0x10000, scoped, tag = 'input window, operand 1, single buffered']
    #allocation5 [shape = 's32[1]{0}', space=sflag, size = 0x4, scoped, tag = 'scoped memory for tpu_custom_call.1']
    #allocation6 [shape = 's32[1]{0}', space=sflag, size = 0x4, scoped, tag = 'scoped memory for tpu_custom_call.1']
    #allocation7 [shape = 'u8[4096]{0}', space=vmem, size = 0x1000, scoped, tag = 'output window, operand 0, single buffered']
    %11 = vsyncpa [#allocation5], 0
    %12 = vsyncpa [#allocation6], 0
    // Predicated region
    $region2: #{tpu_custom_call.1} parent=1 // pred_check
      _
    $region3: #{tpu_custom_call.1} parent=1 // pred_check_branch
      %14 = sbr.rel (0) target = $region5
    $region4: #{tpu_custom_call.1} parent=1 // pred_region
      _
    $region5: #{tpu_custom_call.1} parent=1 // pred_fallthru
      _
    // Predicated region
    $region6: #{tpu_custom_call.1} parent=1 // pred_check
      _
    $region7: #{tpu_custom_call.1} parent=1 // pred_check_branch
      %16 = sbr.rel (0) target = $region9
    $region8: #{tpu_custom_call.1} parent=1 // pred_region
      %s18 = ssub.s32 2048, 2048
      %19 = vsyncadd [#allocation5], %s18
      %s20 = sshll.u32 [#allocation4], 4
      %s21 = int_to_ptr.vmem [resolvable:$true] %s20
      %26 = dma.hbm_to_vmem [thread:$0]  %s1, 2048, %s21, [#allocation5], 64, 64, 4
    $region9: #{tpu_custom_call.1} parent=1 // pred_fallthru
      _
    // Predicated region
    $region10: #{tpu_custom_call.1} parent=1 // pred_check
      _
    $region11: #{tpu_custom_call.1} parent=1 // pred_check_branch
      %28 = sbr.rel (0) target = $region13
    $region12: #{tpu_custom_call.1} parent=1 // pred_region
      _
    $region13: #{tpu_custom_call.1} parent=1 // pred_fallthru
      _
    // Predicated region
    $region14: #{tpu_custom_call.1} parent=1 // pred_check
      _
    $region15: #{tpu_custom_call.1} parent=1 // pred_check_branch
      %30 = sbr.rel (0) target = $region17
    $region16: #{tpu_custom_call.1} parent=1 // pred_region
      _
    $region17: #{tpu_custom_call.1} parent=1 // pred_fallthru
      _
    // Predicated region
    $region18: #{tpu_custom_call.1} parent=1 // pred_check
      _
    $region19: #{tpu_custom_call.1} parent=1 // pred_check_branch
      %32 = sbr.rel (0) target = $region21
    $region20: #{tpu_custom_call.1} parent=1 // pred_region
      _
    $region21: #{tpu_custom_call.1} parent=1 // pred_fallthru
      _
    // Predicated region
    $region22: #{tpu_custom_call.1} parent=1 // pred_check
      _
    $region23: #{tpu_custom_call.1} parent=1 // pred_check_branch
      %34 = sbr.rel (0) target = $region25
    $region24: #{tpu_custom_call.1} parent=1 // pred_region
      %35 = dma.done [#allocation5], 2048
    $region25: #{tpu_custom_call.1} parent=1 // pred_fallthru
      _
    // Predicated region
    $region26: #{tpu_custom_call.1} parent=1 // pred_check
      _
    $region27: #{tpu_custom_call.1} parent=1 // pred_check_branch
      %38 = sbr.rel target = $region29
    $region28: #{tpu_custom_call.1} parent=1 // pred_region
      %39 = sst [smem:[#allocation10]] [#allocation9]
      %40 = sst [smem:[#allocation11]] [#allocation8]
    $region29: #{tpu_custom_call.1} parent=1 // pred_fallthru
      _
    %42 = shalt.err (0)
    %s44 = sshll.u32 [#allocation2], 4
    %s45 = int_to_ptr.vmem [resolvable:$true] %s44
    %47 = dma.hbm_to_vmem [thread:$0]  %s5, 2048, %s45, [#allocation3]
    %v48 = vld [vmem:[%s0] sm:$0xff]
    %v49 = vld [vmem:[%s0 + $0x8] sm:$0xff]
    %v50 = vld [vmem:[%s0 + $0x10] sm:$0xff]
    %v51 = vld [vmem:[%s0 + $0x18] sm:$0xff]
    %v52 = vld [vmem:[%s0 + $0x20] sm:$0xff]
    %v53 = vld [vmem:[%s0 + $0x28] sm:$0xff]
    %v54 = vld [vmem:[%s0 + $0x30] sm:$0xff]
    %v55 = vld [vmem:[%s0 + $0x38] sm:$0xff]
    %v56 = vlaneseq
    %v57 = vand.u32 %v56, 127
    %v58 = vadd.s32 %v57, 128
    %59 = vset.pattern.permute.xlu0 0
    %60 = vperm.xlu0 %59, %v48
    %v61 = vpop.permute.xlu0 %60
    %62 = vset.pattern.permute.xlu0 0
    %63 = vperm.xlu0 %62, %v49
    %v64 = vpop.permute.xlu0 %63
    %65 = vset.pattern.permute.xlu0 0
    %66 = vperm.xlu0 %65, %v50
    %v67 = vpop.permute.xlu0 %66
    %68 = vset.pattern.permute.xlu0 0
    %69 = vperm.xlu0 %68, %v51
    %v70 = vpop.permute.xlu0 %69
    %71 = vset.pattern.permute.xlu0 0
    %72 = vperm.xlu0 %71, %v52
    %v73 = vpop.permute.xlu0 %72
    %74 = vset.pattern.permute.xlu0 0
    %75 = vperm.xlu0 %74, %v53
    %v76 = vpop.permute.xlu0 %75
    %77 = vset.pattern.permute.xlu0 0
    %78 = vperm.xlu0 %77, %v54
    %v79 = vpop.permute.xlu0 %78
    %80 = vset.pattern.permute.xlu0 0
    %81 = vperm.xlu0 %80, %v55
    %v82 = vpop.permute.xlu0 %81
    %vm83 = vcmp.eq.s32.totalorder %v57, %v61
    %vm84 = vcmp.eq.s32.totalorder %v58, %v61
    %vm85 = vcmp.eq.s32.totalorder %v57, %v64
    %vm86 = vcmp.eq.s32.totalorder %v58, %v64
    %vm87 = vcmp.eq.s32.totalorder %v57, %v67
    %vm88 = vcmp.eq.s32.totalorder %v58, %v67
    %vm89 = vcmp.eq.s32.totalorder %v57, %v70
    %vm90 = vcmp.eq.s32.totalorder %v58, %v70
    %vm91 = vcmp.eq.s32.totalorder %v57, %v73
    %vm92 = vcmp.eq.s32.totalorder %v58, %v73
    %vm93 = vcmp.eq.s32.totalorder %v57, %v76
    %vm94 = vcmp.eq.s32.totalorder %v58, %v76
    %vm95 = vcmp.eq.s32.totalorder %v57, %v79
    %vm96 = vcmp.eq.s32.totalorder %v58, %v79
    %vm97 = vcmp.eq.s32.totalorder %v57, %v82
    %vm98 = vcmp.eq.s32.totalorder %v58, %v82
    %v99 = vsel %vm83, 1, 0
    %v100 = vsel %vm84, 1, 0
    %v101 = vsel %vm85, 1, 0
    %v102 = vsel %vm86, 1, 0
    %v103 = vsel %vm87, 1, 0
    %v104 = vsel %vm88, 1, 0
    %v105 = vsel %vm89, 1, 0
    %v106 = vsel %vm90, 1, 0
    %v107 = vsel %vm91, 1, 0
    %v108 = vsel %vm92, 1, 0
    %v109 = vsel %vm93, 1, 0
    %v110 = vsel %vm94, 1, 0
    %v111 = vsel %vm95, 1, 0
    %v112 = vsel %vm96, 1, 0
    %v113 = vsel %vm97, 1, 0
    %v114 = vsel %vm98, 1, 0
    %v115 = vcvt.s32.f32 %v99
    %v116 = vcvt.s32.f32 %v100
    %v117 = vcvt.s32.f32 %v101
    %v118 = vcvt.s32.f32 %v102
    %v119 = vcvt.s32.f32 %v103
    %v120 = vcvt.s32.f32 %v104
    %v121 = vcvt.s32.f32 %v105
    %v122 = vcvt.s32.f32 %v106
    %v123 = vcvt.s32.f32 %v107
    %v124 = vcvt.s32.f32 %v108
    %v125 = vcvt.s32.f32 %v109
    %v126 = vcvt.s32.f32 %v110
    %v127 = vcvt.s32.f32 %v111
    %v128 = vcvt.s32.f32 %v112
    %v129 = vcvt.s32.f32 %v113
    %v130 = vcvt.s32.f32 %v114
    %v131 = vpack.c.bf16 %v117, %v115
    %v132 = vpack.c.bf16 %v118, %v116
    %v133 = vpack.c.bf16 %v121, %v119
    %v134 = vpack.c.bf16 %v122, %v120
    %v135 = vpack.c.bf16 %v125, %v123
    %v136 = vpack.c.bf16 %v126, %v124
    %v137 = vpack.c.bf16 %v129, %v127
    %v138 = vpack.c.bf16 %v130, %v128
    %v139 = vld [vmem:[#allocation4] sm:$0xf]
    %v140 = vld [vmem:[#allocation4 + $0x4] sm:$0xf]
    %v141 = vld [vmem:[#allocation4 + $0x8] sm:$0xf]
    %v142 = vld [vmem:[#allocation4 + $0xc] sm:$0xf]
    %v143 = vld [vmem:[#allocation4 + $0x10] sm:$0xf]
    %v144 = vld [vmem:[#allocation4 + $0x14] sm:$0xf]
    %v145 = vld [vmem:[#allocation4 + $0x18] sm:$0xf]
    %v146 = vld [vmem:[#allocation4 + $0x1c] sm:$0xf]
    %v147 = vld [vmem:[#allocation4 + $0x20] sm:$0xf]
    %v148 = vld [vmem:[#allocation4 + $0x24] sm:$0xf]
    %v149 = vld [vmem:[#allocation4 + $0x28] sm:$0xf]
    %v150 = vld [vmem:[#allocation4 + $0x2c] sm:$0xf]
    %v151 = vld [vmem:[#allocation4 + $0x30] sm:$0xf]
    %v152 = vld [vmem:[#allocation4 + $0x34] sm:$0xf]
    %v153 = vld [vmem:[#allocation4 + $0x38] sm:$0xf]
    %v154 = vld [vmem:[#allocation4 + $0x3c] sm:$0xf]
    %v155 = vld [vmem:[#allocation4 + $0x40] sm:$0xf]
    %v156 = vld [vmem:[#allocation4 + $0x44] sm:$0xf]
    %v157 = vld [vmem:[#allocation4 + $0x48] sm:$0xf]
    %v158 = vld [vmem:[#allocation4 + $0x4c] sm:$0xf]
    %v159 = vld [vmem:[#allocation4 + $0x50] sm:$0xf]
    %v160 = vld [vmem:[#allocation4 + $0x54] sm:$0xf]
    %v161 = vld [vmem:[#allocation4 + $0x58] sm:$0xf]
    %v162 = vld [vmem:[#allocation4 + $0x5c] sm:$0xf]
    %v163 = vld [vmem:[#allocation4 + $0x60] sm:$0xf]
    %v164 = vld [vmem:[#allocation4 + $0x64] sm:$0xf]
    %v165 = vld [vmem:[#allocation4 + $0x68] sm:$0xf]
    %v166 = vld [vmem:[#allocation4 + $0x6c] sm:$0xf]
    %v167 = vld [vmem:[#allocation4 + $0x70] sm:$0xf]
    %v168 = vld [vmem:[#allocation4 + $0x74] sm:$0xf]
    %v169 = vld [vmem:[#allocation4 + $0x78] sm:$0xf]
    %v170 = vld [vmem:[#allocation4 + $0x7c] sm:$0xf]
    %v171 = vld [vmem:[%s3] sm:$0x1]
    %v173 = vlaneseq
    %v174 = vshrl.u32 %v173, 7
    %v175 = vsub.s32 0, %v174
    %v176 = vrot.slane %v171, %v175
    %v210 = vunpack.c.l.b16 %v139
    %v211 = vunpack.c.l.b16 %v140
    %v212 = vunpack.c.l.b16 %v141
    %v213 = vunpack.c.l.b16 %v142
    %v214 = vunpack.c.l.b16 %v143
    %v215 = vunpack.c.l.b16 %v144
    %v216 = vunpack.c.l.b16 %v145
    %v217 = vunpack.c.l.b16 %v146
    %v218 = vunpack.c.l.b16 %v147
    %v219 = vunpack.c.l.b16 %v148
    %v220 = vunpack.c.l.b16 %v149
    %v221 = vunpack.c.l.b16 %v150
    %v222 = vunpack.c.l.b16 %v151
    %v223 = vunpack.c.l.b16 %v152
    %v224 = vunpack.c.l.b16 %v153
    %v225 = vunpack.c.l.b16 %v154
    %v226 = vunpack.c.l.b16 %v155
    %v227 = vunpack.c.l.b16 %v156
    %v228 = vunpack.c.l.b16 %v157
    %v229 = vunpack.c.l.b16 %v158
    %v230 = vunpack.c.l.b16 %v159
    %v231 = vunpack.c.l.b16 %v160
    %v232 = vunpack.c.l.b16 %v161
    %v233 = vunpack.c.l.b16 %v162
    %v234 = vunpack.c.l.b16 %v163
    %v235 = vunpack.c.l.b16 %v164
    %v236 = vunpack.c.l.b16 %v165
    %v237 = vunpack.c.l.b16 %v166
    %v238 = vunpack.c.l.b16 %v167
    %v239 = vunpack.c.l.b16 %v168
    %v240 = vunpack.c.l.b16 %v169
    %v241 = vunpack.c.l.b16 %v170
    %v242 = vpack.c.b16 %v211, %v210
    %v243 = vpack.c.b16 %v213, %v212
    %v244 = vpack.c.b16 %v215, %v214
    %v245 = vpack.c.b16 %v217, %v216
    %v246 = vpack.c.b16 %v219, %v218
    %v247 = vpack.c.b16 %v221, %v220
    %v248 = vpack.c.b16 %v223, %v222
    %v249 = vpack.c.b16 %v225, %v224
    %v250 = vpack.c.b16 %v227, %v226
    %v251 = vpack.c.b16 %v229, %v228
    %v252 = vpack.c.b16 %v231, %v230
    %v253 = vpack.c.b16 %v233, %v232
    %v254 = vpack.c.b16 %v235, %v234
    %v255 = vpack.c.b16 %v237, %v236
    %v256 = vpack.c.b16 %v239, %v238
    %v257 = vpack.c.b16 %v241, %v240
    %274 = vmatprep.subr.bf16.mxu0 0
    %275 = vmatpush1.bf16.msra.mxu0 %v242
    %276 = vmatprep.subr.bf16.mxu0 0
    %277 = vmatpush1.bf16.msra.mxu0 %v243
    %278 = vmatprep.subr.bf16.mxu0 0
    %279 = vmatpush1.bf16.msra.mxu0 %v244
    %280 = vmatprep.subr.bf16.mxu0 0
    %281 = vmatpush1.bf16.msra.mxu0 %v245
    %282 = vmatprep.subr.bf16.mxu0 0
    %283 = vmatpush1.bf16.msra.mxu0 %v246
    %284 = vmatprep.subr.bf16.mxu0 0
    %285 = vmatpush1.bf16.msra.mxu0 %v247
    %286 = vmatprep.subr.bf16.mxu0 0
    %287 = vmatpush1.bf16.msra.mxu0 %v248
    %288 = vmatprep.subr.bf16.mxu0 0
    %289 = vmatpush1.bf16.msra.mxu0 %v249
    %290 = vmatprep.subr.bf16.mxu0 0
    %291 = vmatpush1.bf16.msra.mxu0 %v250
    %292 = vmatprep.subr.bf16.mxu0 0
    %293 = vmatpush1.bf16.msra.mxu0 %v251
    %294 = vmatprep.subr.bf16.mxu0 0
    %295 = vmatpush1.bf16.msra.mxu0 %v252
    %296 = vmatprep.subr.bf16.mxu0 0
    %297 = vmatpush1.bf16.msra.mxu0 %v253
    %298 = vmatprep.subr.bf16.mxu0 0
    %299 = vmatpush1.bf16.msra.mxu0 %v254
    %300 = vmatprep.subr.bf16.mxu0 0
    %301 = vmatpush1.bf16.msra.mxu0 %v255
    %302 = vmatprep.subr.bf16.mxu0 0
    %303 = vmatpush1.bf16.msra.mxu0 %v256
    %304 = vmatprep.subr.bf16.mxu0 0
    %305 = vmatpush1.bf16.msra.mxu0 %v257
    %306 = vmatprep.mubr.bf16.mxu0 %v132
    %307 = vmatmul.mubr.bf16.gmra.mrb[0].mxu0 %v131
    %v308 = vpop.f32.mrb[0].mxu0
    %v309 = vadd.f32 %v176, %v308
    %v310 = vpop.f32.mrb[0].mxu0
    %v311 = vpop.f32.mrb[0].mxu0
    %v312 = vadd.f32 %v176, %v311
    %v313 = vpop.f32.mrb[0].mxu0
    %314 = vmatprep.mubr.bf16.mxu0 %v134
    %315 = vmatmul.mubr.bf16.gmra.mrb[0].mxu0 %v133
    %v316 = vpop.f32.mrb[0].mxu0
    %v317 = vadd.f32 %v176, %v316
    %v318 = vpop.f32.mrb[0].mxu0
    %v319 = vpop.f32.mrb[0].mxu0
    %v320 = vadd.f32 %v176, %v319
    %v321 = vpop.f32.mrb[0].mxu0
    %322 = vmatprep.mubr.bf16.mxu0 %v136
    %323 = vmatmul.mubr.bf16.gmra.mrb[0].mxu0 %v135
    %v324 = vpop.f32.mrb[0].mxu0
    %v325 = vadd.f32 %v176, %v324
    %v326 = vpop.f32.mrb[0].mxu0
    %v327 = vpop.f32.mrb[0].mxu0
    %v328 = vadd.f32 %v176, %v327
    %v329 = vpop.f32.mrb[0].mxu0
    %330 = vmatprep.mubr.bf16.mxu0 %v138
    %331 = vmatmul.mubr.bf16.gmra.mrb[0].mxu0 %v137
    %v332 = vpop.f32.mrb[0].mxu0
    %v333 = vadd.f32 %v176, %v332
    %v334 = vpop.f32.mrb[0].mxu0
    %v335 = vpop.f32.mrb[0].mxu0
    %v336 = vadd.f32 %v176, %v335
    %v337 = vpop.f32.mrb[0].mxu0
    %338 = vdwg.mxu0
    %v339 = vld [vmem:[%s2] sm:$0xff]
    %v340 = vld [vmem:[%s2 + $0x8] sm:$0xff]
    %v341 = vld [vmem:[%s2 + $0x10] sm:$0xff]
    %v342 = vld [vmem:[%s2 + $0x18] sm:$0xff]
    %vm343 = vcmask 261120
    %v345 = vsel %vm343, 0.0, 0
    %347 = vmatprep.subr.mxu0 0.0
    %348 = vmatpush1.msra.mxu0 %v339
    %349 = vmatprep.subr.mxu0 0.0
    %350 = vmatpush1.msra.mxu0 %v340
    %351 = vmatprep.subr.mxu0 0.0
    %352 = vmatpush1.msra.mxu0 %v341
    %353 = vmatprep.subr.mxu0 0.0
    %354 = vmatpush1.msra.mxu0 %v342
    %355 = vmatprep.subr.mxu0 0.0
    %356 = vmatpush1.msra.mxu0 0.0
    %357 = vmatprep.subr.mxu0 0.0
    %358 = vmatpush1.msra.mxu0 0.0
    %359 = vmatprep.subr.mxu0 0.0
    %360 = vmatpush1.msra.mxu0 0.0
    %361 = vmatprep.subr.mxu0 0.0
    %362 = vmatpush1.msra.mxu0 0.0
    %363 = vmatprep.subr.mxu0 0.0
    %364 = vmatpush1.msra.mxu0 0.0
    %365 = vmatprep.subr.mxu0 0.0
    %366 = vmatpush1.msra.mxu0 0.0
    %367 = vmatprep.subr.mxu0 0.0
    %368 = vmatpush1.msra.mxu0 0.0
    %369 = vmatprep.subr.mxu0 0.0
    %370 = vmatpush1.msra.mxu0 0.0
    %371 = vmatprep.subr.mxu0 0.0
    %372 = vmatpush1.msra.mxu0 0.0
    %373 = vmatprep.subr.mxu0 0.0
    %374 = vmatpush1.msra.mxu0 0.0
    %375 = vmatprep.subr.mxu0 0.0
    %376 = vmatpush1.msra.mxu0 0.0
    %377 = vmatprep.subr.mxu0 0.0
    %378 = vmatpush1.msra.mxu0 0.0
    %379 = vmatprep.subr.mxu0 0.0
    %380 = vmatpush1.msra.mxu0 0.0
    %381 = vmatprep.subr.mxu0 0.0
    %382 = vmatpush1.msra.mxu0 0.0
    %383 = vmatprep.subr.mxu0 0.0
    %384 = vmatpush1.msra.mxu0 0.0
    %385 = vmatprep.subr.mxu0 0.0
    %386 = vmatpush1.msra.mxu0 0.0
    %387 = vmatprep.subr.mxu0 0.0
    %388 = vmatpush1.msra.mxu0 0.0
    %389 = vmatprep.subr.mxu0 0.0
    %390 = vmatpush1.msra.mxu0 0.0
    %391 = vmatprep.subr.mxu0 0.0
    %392 = vmatpush1.msra.mxu0 0.0
    %393 = vmatprep.subr.mxu0 0.0
    %394 = vmatpush1.msra.mxu0 0.0
    %395 = vmatprep.subr.mxu0 0.0
    %396 = vmatpush1.msra.mxu0 0.0
    %397 = vmatprep.subr.mxu0 0.0
    %398 = vmatpush1.msra.mxu0 0.0
    %399 = vmatprep.subr.mxu0 0.0
    %400 = vmatpush1.msra.mxu0 0.0
    %401 = vmatprep.subr.mxu0 0.0
    %402 = vmatpush1.msra.mxu0 0.0
    %403 = vmatprep.subr.mxu0 0.0
    %404 = vmatpush1.msra.mxu0 0.0
    %405 = vmatprep.subr.mxu0 0.0
    %406 = vmatpush1.msra.mxu0 0.0
    %407 = vmatprep.subr.mxu0 0.0
    %408 = vmatpush1.msra.mxu0 0.0
    %409 = vmatprep.subr.mxu0 0.0
    %410 = vmatpush1.msra.mxu0 0.0
    %411 = vmatprep.mubr.f32.mxu0 0.0
    %412 = vmatmul.mubr.f32.gmra.mrb[0].mxu0 %v345
    %v413 = vpop.f32.mrb[0].mxu0
    %v414 = vadd.f32 0.0, %v413
    %v415 = vpop.f32.mrb[0].mxu0
    %416 = vdwg.mxu0
    %v417 = vadd.f32 %v309, %v414
    %v418 = vtanh.pop %v417
    %v419 = vmul.f32 %v418, 0.5
    %v420 = vadd.f32 %v419, 0.5
    %v421 = vmul.f32 %v420, 0.0
    %423 = vrot.lane.b32.xlu0 %v418, 64
    %v424 = vpop.permute.xlu0 %423
    %v426 = vmul.f32 %v420, %v424
    %428 = vrot.lane.b32.xlu0 %v426, 32
    %v429 = vpop.permute.xlu0 %428
    %v431 = vadd.f32 %v421, %v429
    %v432 = vtanh.pop %v431
    %434 = vrot.lane.b32.xlu0 %v432, 64
    %v435 = vpop.permute.xlu0 %434
    %v437 = vmul.f32 %v420, %v435
    %439 = vrot.lane.b32.xlu0 %v437, 32
    %v440 = vpop.permute.xlu0 %439
    %v441 = vsel %vm343, %v440, 0
    %443 = vmatprep.subr.mxu0 0.0
    %444 = vmatpush1.msra.mxu0 %v339
    %445 = vmatprep.subr.mxu0 0.0
    %446 = vmatpush1.msra.mxu0 %v340
    %447 = vmatprep.subr.mxu0 0.0
    %448 = vmatpush1.msra.mxu0 %v341
    %449 = vmatprep.subr.mxu0 0.0
    %450 = vmatpush1.msra.mxu0 %v342
    %451 = vmatprep.subr.mxu0 0.0
    %452 = vmatpush1.msra.mxu0 0.0
    %453 = vmatprep.subr.mxu0 0.0
    %454 = vmatpush1.msra.mxu0 0.0
    %455 = vmatprep.subr.mxu0 0.0
    %456 = vmatpush1.msra.mxu0 0.0
    %457 = vmatprep.subr.mxu0 0.0
    %458 = vmatpush1.msra.mxu0 0.0
    %459 = vmatprep.subr.mxu0 0.0
    %460 = vmatpush1.msra.mxu0 0.0
    %461 = vmatprep.subr.mxu0 0.0
    %462 = vmatpush1.msra.mxu0 0.0
    %463 = vmatprep.subr.mxu0 0.0
    %464 = vmatpush1.msra.mxu0 0.0
    %465 = vmatprep.subr.mxu0 0.0
    %466 = vmatpush1.msra.mxu0 0.0
    %467 = vmatprep.subr.mxu0 0.0
    %468 = vmatpush1.msra.mxu0 0.0
    %469 = vmatprep.subr.mxu0 0.0
    %470 = vmatpush1.msra.mxu0 0.0
    %471 = vmatprep.subr.mxu0 0.0
    %472 = vmatpush1.msra.mxu0 0.0
    %473 = vmatprep.subr.mxu0 0.0
    %474 = vmatpush1.msra.mxu0 0.0
    %475 = vmatprep.subr.mxu0 0.0
    %476 = vmatpush1.msra.mxu0 0.0
    %477 = vmatprep.subr.mxu0 0.0
    %478 = vmatpush1.msra.mxu0 0.0
    %479 = vmatprep.subr.mxu0 0.0
    %480 = vmatpush1.msra.mxu0 0.0
    %481 = vmatprep.subr.mxu0 0.0
    %482 = vmatpush1.msra.mxu0 0.0
    %483 = vmatprep.subr.mxu0 0.0
    %484 = vmatpush1.msra.mxu0 0.0
    %485 = vmatprep.subr.mxu0 0.0
    %486 = vmatpush1.msra.mxu0 0.0
    %487 = vmatprep.subr.mxu0 0.0
    %488 = vmatpush1.msra.mxu0 0.0
    %489 = vmatprep.subr.mxu0 0.0
    %490 = vmatpush1.msra.mxu0 0.0
    %491 = vmatprep.subr.mxu0 0.0
    %492 = vmatpush1.msra.mxu0 0.0
    %493 = vmatprep.subr.mxu0 0.0
    %494 = vmatpush1.msra.mxu0 0.0
    %495 = vmatprep.subr.mxu0 0.0
    %496 = vmatpush1.msra.mxu0 0.0
    %497 = vmatprep.subr.mxu0 0.0
    %498 = vmatpush1.msra.mxu0 0.0
    %499 = vmatprep.subr.mxu0 0.0
    %500 = vmatpush1.msra.mxu0 0.0
    %501 = vmatprep.subr.mxu0 0.0
    %502 = vmatpush1.msra.mxu0 0.0
    %503 = vmatprep.subr.mxu0 0.0
    %504 = vmatpush1.msra.mxu0 0.0
    %505 = vmatprep.subr.mxu0 0.0
    %506 = vmatpush1.msra.mxu0 0.0
    %507 = vmatprep.mubr.f32.mxu0 0.0
    %508 = vmatmul.mubr.f32.gmra.mrb[0].mxu0 %v441
    %v509 = vpop.f32.mrb[0].mxu0
    %v510 = vadd.f32 0.0, %v509
    %v511 = vpop.f32.mrb[0].mxu0
    %512 = vdwg.mxu0
    %v513 = vadd.f32 %v312, %v510
    %v514 = vtanh.pop %v513
    %v515 = vmul.f32 %v514, 0.5
    %v516 = vadd.f32 %v515, 0.5
    %v517 = vmul.f32 %v516, %v431
    %519 = vrot.lane.b32.xlu0 %v514, 64
    %v520 = vpop.permute.xlu0 %519
    %v522 = vmul.f32 %v516, %v520
    %524 = vrot.lane.b32.xlu0 %v522, 32
    %v525 = vpop.permute.xlu0 %524
    %v527 = vadd.f32 %v517, %v525
    %v528 = vtanh.pop %v527
    %530 = vrot.lane.b32.xlu0 %v528, 64
    %v531 = vpop.permute.xlu0 %530
    %v533 = vmul.f32 %v516, %v531
    %535 = vrot.lane.b32.xlu0 %v533, 32
    %v536 = vpop.permute.xlu0 %535
    %v537 = vsel %vm343, %v536, 0
    %539 = vmatprep.subr.mxu0 0.0
    %540 = vmatpush1.msra.mxu0 %v339
    %541 = vmatprep.subr.mxu0 0.0
    %542 = vmatpush1.msra.mxu0 %v340
    %543 = vmatprep.subr.mxu0 0.0
    %544 = vmatpush1.msra.mxu0 %v341
    %545 = vmatprep.subr.mxu0 0.0
    %546 = vmatpush1.msra.mxu0 %v342
    %547 = vmatprep.subr.mxu0 0.0
    %548 = vmatpush1.msra.mxu0 0.0
    %549 = vmatprep.subr.mxu0 0.0
    %550 = vmatpush1.msra.mxu0 0.0
    %551 = vmatprep.subr.mxu0 0.0
    %552 = vmatpush1.msra.mxu0 0.0
    %553 = vmatprep.subr.mxu0 0.0
    %554 = vmatpush1.msra.mxu0 0.0
    %555 = vmatprep.subr.mxu0 0.0
    %556 = vmatpush1.msra.mxu0 0.0
    %557 = vmatprep.subr.mxu0 0.0
    %558 = vmatpush1.msra.mxu0 0.0
    %559 = vmatprep.subr.mxu0 0.0
    %560 = vmatpush1.msra.mxu0 0.0
    %561 = vmatprep.subr.mxu0 0.0
    %562 = vmatpush1.msra.mxu0 0.0
    %563 = vmatprep.subr.mxu0 0.0
    %564 = vmatpush1.msra.mxu0 0.0
    %565 = vmatprep.subr.mxu0 0.0
    %566 = vmatpush1.msra.mxu0 0.0
    %567 = vmatprep.subr.mxu0 0.0
    %568 = vmatpush1.msra.mxu0 0.0
    %569 = vmatprep.subr.mxu0 0.0
    %570 = vmatpush1.msra.mxu0 0.0
    %571 = vmatprep.subr.mxu0 0.0
    %572 = vmatpush1.msra.mxu0 0.0
    %573 = vmatprep.subr.mxu0 0.0
    %574 = vmatpush1.msra.mxu0 0.0
    %575 = vmatprep.subr.mxu0 0.0
    %576 = vmatpush1.msra.mxu0 0.0
    %577 = vmatprep.subr.mxu0 0.0
    %578 = vmatpush1.msra.mxu0 0.0
    %579 = vmatprep.subr.mxu0 0.0
    %580 = vmatpush1.msra.mxu0 0.0
    %581 = vmatprep.subr.mxu0 0.0
    %582 = vmatpush1.msra.mxu0 0.0
    %583 = vmatprep.subr.mxu0 0.0
    %584 = vmatpush1.msra.mxu0 0.0
    %585 = vmatprep.subr.mxu0 0.0
    %586 = vmatpush1.msra.mxu0 0.0
    %587 = vmatprep.subr.mxu0 0.0
    %588 = vmatpush1.msra.mxu0 0.0
    %589 = vmatprep.subr.mxu0 0.0
    %590 = vmatpush1.msra.mxu0 0.0
    %591 = vmatprep.subr.mxu0 0.0
    %592 = vmatpush1.msra.mxu0 0.0
    %593 = vmatprep.subr.mxu0 0.0
    %594 = vmatpush1.msra.mxu0 0.0
    %595 = vmatprep.subr.mxu0 0.0
    %596 = vmatpush1.msra.mxu0 0.0
    %597 = vmatprep.subr.mxu0 0.0
    %598 = vmatpush1.msra.mxu0 0.0
    %599 = vmatprep.subr.mxu0 0.0
    %600 = vmatpush1.msra.mxu0 0.0
    %601 = vmatprep.subr.mxu0 0.0
    %602 = vmatpush1.msra.mxu0 0.0
    %603 = vmatprep.mubr.f32.mxu0 0.0
    %604 = vmatmul.mubr.f32.gmra.mrb[0].mxu0 %v537
    %v605 = vpop.f32.mrb[0].mxu0
    %v606 = vadd.f32 0.0, %v605
    %v607 = vpop.f32.mrb[0].mxu0
    %608 = vdwg.mxu0
    %v609 = vadd.f32 %v317, %v606
    %v610 = vtanh.pop %v609
    %v611 = vmul.f32 %v610, 0.5
    %v612 = vadd.f32 %v611, 0.5
    %v613 = vmul.f32 %v612, %v527
    %615 = vrot.lane.b32.xlu0 %v610, 64
    %v616 = vpop.permute.xlu0 %615
    %v618 = vmul.f32 %v612, %v616
    %620 = vrot.lane.b32.xlu0 %v618, 32
    %v621 = vpop.permute.xlu0 %620
    %v623 = vadd.f32 %v613, %v621
    %v624 = vtanh.pop %v623
    %626 = vrot.lane.b32.xlu0 %v624, 64
    %v627 = vpop.permute.xlu0 %626
    %v629 = vmul.f32 %v612, %v627
    %631 = vrot.lane.b32.xlu0 %v629, 32
    %v632 = vpop.permute.xlu0 %631
    %v633 = vsel %vm343, %v632, 0
    %635 = vmatprep.subr.mxu0 0.0
    %636 = vmatpush1.msra.mxu0 %v339
    %637 = vmatprep.subr.mxu0 0.0
    %638 = vmatpush1.msra.mxu0 %v340
    %639 = vmatprep.subr.mxu0 0.0
    %640 = vmatpush1.msra.mxu0 %v341
    %641 = vmatprep.subr.mxu0 0.0
    %642 = vmatpush1.msra.mxu0 %v342
    %643 = vmatprep.subr.mxu0 0.0
    %644 = vmatpush1.msra.mxu0 0.0
    %645 = vmatprep.subr.mxu0 0.0
    %646 = vmatpush1.msra.mxu0 0.0
    %647 = vmatprep.subr.mxu0 0.0
    %648 = vmatpush1.msra.mxu0 0.0
    %649 = vmatprep.subr.mxu0 0.0
    %650 = vmatpush1.msra.mxu0 0.0
    %651 = vmatprep.subr.mxu0 0.0
    %652 = vmatpush1.msra.mxu0 0.0
    %653 = vmatprep.subr.mxu0 0.0
    %654 = vmatpush1.msra.mxu0 0.0
    %655 = vmatprep.subr.mxu0 0.0
    %656 = vmatpush1.msra.mxu0 0.0
    %657 = vmatprep.subr.mxu0 0.0
    %658 = vmatpush1.msra.mxu0 0.0
    %659 = vmatprep.subr.mxu0 0.0
    %660 = vmatpush1.msra.mxu0 0.0
    %661 = vmatprep.subr.mxu0 0.0
    %662 = vmatpush1.msra.mxu0 0.0
    %663 = vmatprep.subr.mxu0 0.0
    %664 = vmatpush1.msra.mxu0 0.0
    %665 = vmatprep.subr.mxu0 0.0
    %666 = vmatpush1.msra.mxu0 0.0
    %667 = vmatprep.subr.mxu0 0.0
    %668 = vmatpush1.msra.mxu0 0.0
    %669 = vmatprep.subr.mxu0 0.0
    %670 = vmatpush1.msra.mxu0 0.0
    %671 = vmatprep.subr.mxu0 0.0
    %672 = vmatpush1.msra.mxu0 0.0
    %673 = vmatprep.subr.mxu0 0.0
    %674 = vmatpush1.msra.mxu0 0.0
    %675 = vmatprep.subr.mxu0 0.0
    %676 = vmatpush1.msra.mxu0 0.0
    %677 = vmatprep.subr.mxu0 0.0
    %678 = vmatpush1.msra.mxu0 0.0
    %679 = vmatprep.subr.mxu0 0.0
    %680 = vmatpush1.msra.mxu0 0.0
    %681 = vmatprep.subr.mxu0 0.0
    %682 = vmatpush1.msra.mxu0 0.0
    %683 = vmatprep.subr.mxu0 0.0
    %684 = vmatpush1.msra.mxu0 0.0
    %685 = vmatprep.subr.mxu0 0.0
    %686 = vmatpush1.msra.mxu0 0.0
    %687 = vmatprep.subr.mxu0 0.0
    %688 = vmatpush1.msra.mxu0 0.0
    %689 = vmatprep.subr.mxu0 0.0
    %690 = vmatpush1.msra.mxu0 0.0
    %691 = vmatprep.subr.mxu0 0.0
    %692 = vmatpush1.msra.mxu0 0.0
    %693 = vmatprep.subr.mxu0 0.0
    %694 = vmatpush1.msra.mxu0 0.0
    %695 = vmatprep.subr.mxu0 0.0
    %696 = vmatpush1.msra.mxu0 0.0
    %697 = vmatprep.subr.mxu0 0.0
    %698 = vmatpush1.msra.mxu0 0.0
    %699 = vmatprep.mubr.f32.mxu0 0.0
    %700 = vmatmul.mubr.f32.gmra.mrb[0].mxu0 %v633
    %v701 = vpop.f32.mrb[0].mxu0
    %v702 = vadd.f32 0.0, %v701
    %v703 = vpop.f32.mrb[0].mxu0
    %704 = vdwg.mxu0
    %v705 = vadd.f32 %v320, %v702
    %v706 = vtanh.pop %v705
    %v707 = vmul.f32 %v706, 0.5
    %v708 = vadd.f32 %v707, 0.5
    %v709 = vmul.f32 %v708, %v623
    %711 = vrot.lane.b32.xlu0 %v706, 64
    %v712 = vpop.permute.xlu0 %711
    %v714 = vmul.f32 %v708, %v712
    %716 = vrot.lane.b32.xlu0 %v714, 32
    %v717 = vpop.permute.xlu0 %716
    %v719 = vadd.f32 %v709, %v717
    %v720 = vtanh.pop %v719
    %722 = vrot.lane.b32.xlu0 %v720, 64
    %v723 = vpop.permute.xlu0 %722
    %v725 = vmul.f32 %v708, %v723
    %727 = vrot.lane.b32.xlu0 %v725, 32
    %v728 = vpop.permute.xlu0 %727
    %v729 = vsel %vm343, %v728, 0
    %731 = vmatprep.subr.mxu0 0.0
    %732 = vmatpush1.msra.mxu0 %v339
    %733 = vmatprep.subr.mxu0 0.0
    %734 = vmatpush1.msra.mxu0 %v340
    %735 = vmatprep.subr.mxu0 0.0
    %736 = vmatpush1.msra.mxu0 %v341
    %737 = vmatprep.subr.mxu0 0.0
    %738 = vmatpush1.msra.mxu0 %v342
    %739 = vmatprep.subr.mxu0 0.0
    %740 = vmatpush1.msra.mxu0 0.0
    %741 = vmatprep.subr.mxu0 0.0
    %742 = vmatpush1.msra.mxu0 0.0
    %743 = vmatprep.subr.mxu0 0.0
    %744 = vmatpush1.msra.mxu0 0.0
    %745 = vmatprep.subr.mxu0 0.0
    %746 = vmatpush1.msra.mxu0 0.0
    %747 = vmatprep.subr.mxu0 0.0
    %748 = vmatpush1.msra.mxu0 0.0
    %749 = vmatprep.subr.mxu0 0.0
    %750 = vmatpush1.msra.mxu0 0.0
    %751 = vmatprep.subr.mxu0 0.0
    %752 = vmatpush1.msra.mxu0 0.0
    %753 = vmatprep.subr.mxu0 0.0
    %754 = vmatpush1.msra.mxu0 0.0
    %755 = vmatprep.subr.mxu0 0.0
    %756 = vmatpush1.msra.mxu0 0.0
    %757 = vmatprep.subr.mxu0 0.0
    %758 = vmatpush1.msra.mxu0 0.0
    %759 = vmatprep.subr.mxu0 0.0
    %760 = vmatpush1.msra.mxu0 0.0
    %761 = vmatprep.subr.mxu0 0.0
    %762 = vmatpush1.msra.mxu0 0.0
    %763 = vmatprep.subr.mxu0 0.0
    %764 = vmatpush1.msra.mxu0 0.0
    %765 = vmatprep.subr.mxu0 0.0
    %766 = vmatpush1.msra.mxu0 0.0
    %767 = vmatprep.subr.mxu0 0.0
    %768 = vmatpush1.msra.mxu0 0.0
    %769 = vmatprep.subr.mxu0 0.0
    %770 = vmatpush1.msra.mxu0 0.0
    %771 = vmatprep.subr.mxu0 0.0
    %772 = vmatpush1.msra.mxu0 0.0
    %773 = vmatprep.subr.mxu0 0.0
    %774 = vmatpush1.msra.mxu0 0.0
    %775 = vmatprep.subr.mxu0 0.0
    %776 = vmatpush1.msra.mxu0 0.0
    %777 = vmatprep.subr.mxu0 0.0
    %778 = vmatpush1.msra.mxu0 0.0
    %779 = vmatprep.subr.mxu0 0.0
    %780 = vmatpush1.msra.mxu0 0.0
    %781 = vmatprep.subr.mxu0 0.0
    %782 = vmatpush1.msra.mxu0 0.0
    %783 = vmatprep.subr.mxu0 0.0
    %784 = vmatpush1.msra.mxu0 0.0
    %785 = vmatprep.subr.mxu0 0.0
    %786 = vmatpush1.msra.mxu0 0.0
    %787 = vmatprep.subr.mxu0 0.0
    %788 = vmatpush1.msra.mxu0 0.0
    %789 = vmatprep.subr.mxu0 0.0
    %790 = vmatpush1.msra.mxu0 0.0
    %791 = vmatprep.subr.mxu0 0.0
    %792 = vmatpush1.msra.mxu0 0.0
    %793 = vmatprep.subr.mxu0 0.0
    %794 = vmatpush1.msra.mxu0 0.0
    %795 = vmatprep.mubr.f32.mxu0 0.0
    %796 = vmatmul.mubr.f32.gmra.mrb[0].mxu0 %v729
    %v797 = vpop.f32.mrb[0].mxu0
    %v798 = vadd.f32 0.0, %v797
    %v799 = vpop.f32.mrb[0].mxu0
    %800 = vdwg.mxu0
    %v801 = vadd.f32 %v325, %v798
    %v802 = vtanh.pop %v801
    %v803 = vmul.f32 %v802, 0.5
    %v804 = vadd.f32 %v803, 0.5
    %v805 = vmul.f32 %v804, %v719
    %807 = vrot.lane.b32.xlu0 %v802, 64
    %v808 = vpop.permute.xlu0 %807
    %v810 = vmul.f32 %v804, %v808
    %812 = vrot.lane.b32.xlu0 %v810, 32
    %v813 = vpop.permute.xlu0 %812
    %v815 = vadd.f32 %v805, %v813
    %v816 = vtanh.pop %v815
    %818 = vrot.lane.b32.xlu0 %v816, 64
    %v819 = vpop.permute.xlu0 %818
    %v821 = vmul.f32 %v804, %v819
    %823 = vrot.lane.b32.xlu0 %v821, 32
    %v824 = vpop.permute.xlu0 %823
    %v825 = vsel %vm343, %v824, 0
    %827 = vmatprep.subr.mxu0 0.0
    %828 = vmatpush1.msra.mxu0 %v339
    %829 = vmatprep.subr.mxu0 0.0
    %830 = vmatpush1.msra.mxu0 %v340
    %831 = vmatprep.subr.mxu0 0.0
    %832 = vmatpush1.msra.mxu0 %v341
    %833 = vmatprep.subr.mxu0 0.0
    %834 = vmatpush1.msra.mxu0 %v342
    %835 = vmatprep.subr.mxu0 0.0
    %836 = vmatpush1.msra.mxu0 0.0
    %837 = vmatprep.subr.mxu0 0.0
    %838 = vmatpush1.msra.mxu0 0.0
    %839 = vmatprep.subr.mxu0 0.0
    %840 = vmatpush1.msra.mxu0 0.0
    %841 = vmatprep.subr.mxu0 0.0
    %842 = vmatpush1.msra.mxu0 0.0
    %843 = vmatprep.subr.mxu0 0.0
    %844 = vmatpush1.msra.mxu0 0.0
    %845 = vmatprep.subr.mxu0 0.0
    %846 = vmatpush1.msra.mxu0 0.0
    %847 = vmatprep.subr.mxu0 0.0
    %848 = vmatpush1.msra.mxu0 0.0
    %849 = vmatprep.subr.mxu0 0.0
    %850 = vmatpush1.msra.mxu0 0.0
    %851 = vmatprep.subr.mxu0 0.0
    %852 = vmatpush1.msra.mxu0 0.0
    %853 = vmatprep.subr.mxu0 0.0
    %854 = vmatpush1.msra.mxu0 0.0
    %855 = vmatprep.subr.mxu0 0.0
    %856 = vmatpush1.msra.mxu0 0.0
    %857 = vmatprep.subr.mxu0 0.0
    %858 = vmatpush1.msra.mxu0 0.0
    %859 = vmatprep.subr.mxu0 0.0
    %860 = vmatpush1.msra.mxu0 0.0
    %861 = vmatprep.subr.mxu0 0.0
    %862 = vmatpush1.msra.mxu0 0.0
    %863 = vmatprep.subr.mxu0 0.0
    %864 = vmatpush1.msra.mxu0 0.0
    %865 = vmatprep.subr.mxu0 0.0
    %866 = vmatpush1.msra.mxu0 0.0
    %867 = vmatprep.subr.mxu0 0.0
    %868 = vmatpush1.msra.mxu0 0.0
    %869 = vmatprep.subr.mxu0 0.0
    %870 = vmatpush1.msra.mxu0 0.0
    %871 = vmatprep.subr.mxu0 0.0
    %872 = vmatpush1.msra.mxu0 0.0
    %873 = vmatprep.subr.mxu0 0.0
    %874 = vmatpush1.msra.mxu0 0.0
    %875 = vmatprep.subr.mxu0 0.0
    %876 = vmatpush1.msra.mxu0 0.0
    %877 = vmatprep.subr.mxu0 0.0
    %878 = vmatpush1.msra.mxu0 0.0
    %879 = vmatprep.subr.mxu0 0.0
    %880 = vmatpush1.msra.mxu0 0.0
    %881 = vmatprep.subr.mxu0 0.0
    %882 = vmatpush1.msra.mxu0 0.0
    %883 = vmatprep.subr.mxu0 0.0
    %884 = vmatpush1.msra.mxu0 0.0
    %885 = vmatprep.subr.mxu0 0.0
    %886 = vmatpush1.msra.mxu0 0.0
    %887 = vmatprep.subr.mxu0 0.0
    %888 = vmatpush1.msra.mxu0 0.0
    %889 = vmatprep.subr.mxu0 0.0
    %890 = vmatpush1.msra.mxu0 0.0
    %891 = vmatprep.mubr.f32.mxu0 0.0
    %892 = vmatmul.mubr.f32.gmra.mrb[0].mxu0 %v825
    %v893 = vpop.f32.mrb[0].mxu0
    %v894 = vadd.f32 0.0, %v893
    %v895 = vpop.f32.mrb[0].mxu0
    %896 = vdwg.mxu0
    %v897 = vadd.f32 %v328, %v894
    %v898 = vtanh.pop %v897
    %v899 = vmul.f32 %v898, 0.5
    %v900 = vadd.f32 %v899, 0.5
    %v901 = vmul.f32 %v900, %v815
    %903 = vrot.lane.b32.xlu0 %v898, 64
    %v904 = vpop.permute.xlu0 %903
    %v906 = vmul.f32 %v900, %v904
    %908 = vrot.lane.b32.xlu0 %v906, 32
    %v909 = vpop.permute.xlu0 %908
    %v911 = vadd.f32 %v901, %v909
    %v912 = vtanh.pop %v911
    %914 = vrot.lane.b32.xlu0 %v912, 64
    %v915 = vpop.permute.xlu0 %914
    %v917 = vmul.f32 %v900, %v915
    %919 = vrot.lane.b32.xlu0 %v917, 32
    %v920 = vpop.permute.xlu0 %919
    %v921 = vsel %vm343, %v920, 0
    %923 = vmatprep.subr.mxu0 0.0
    %924 = vmatpush1.msra.mxu0 %v339
    %925 = vmatprep.subr.mxu0 0.0
    %926 = vmatpush1.msra.mxu0 %v340
    %927 = vmatprep.subr.mxu0 0.0
    %928 = vmatpush1.msra.mxu0 %v341
    %929 = vmatprep.subr.mxu0 0.0
    %930 = vmatpush1.msra.mxu0 %v342
    %931 = vmatprep.subr.mxu0 0.0
    %932 = vmatpush1.msra.mxu0 0.0
    %933 = vmatprep.subr.mxu0 0.0
    %934 = vmatpush1.msra.mxu0 0.0
    %935 = vmatprep.subr.mxu0 0.0
    %936 = vmatpush1.msra.mxu0 0.0
    %937 = vmatprep.subr.mxu0 0.0
    %938 = vmatpush1.msra.mxu0 0.0
    %939 = vmatprep.subr.mxu0 0.0
    %940 = vmatpush1.msra.mxu0 0.0
    %941 = vmatprep.subr.mxu0 0.0
    %942 = vmatpush1.msra.mxu0 0.0
    %943 = vmatprep.subr.mxu0 0.0
    %944 = vmatpush1.msra.mxu0 0.0
    %945 = vmatprep.subr.mxu0 0.0
    %946 = vmatpush1.msra.mxu0 0.0
    %947 = vmatprep.subr.mxu0 0.0
    %948 = vmatpush1.msra.mxu0 0.0
    %949 = vmatprep.subr.mxu0 0.0
    %950 = vmatpush1.msra.mxu0 0.0
    %951 = vmatprep.subr.mxu0 0.0
    %952 = vmatpush1.msra.mxu0 0.0
    %953 = vmatprep.subr.mxu0 0.0
    %954 = vmatpush1.msra.mxu0 0.0
    %955 = vmatprep.subr.mxu0 0.0
    %956 = vmatpush1.msra.mxu0 0.0
    %957 = vmatprep.subr.mxu0 0.0
    %958 = vmatpush1.msra.mxu0 0.0
    %959 = vmatprep.subr.mxu0 0.0
    %960 = vmatpush1.msra.mxu0 0.0
    %961 = vmatprep.subr.mxu0 0.0
    %962 = vmatpush1.msra.mxu0 0.0
    %963 = vmatprep.subr.mxu0 0.0
    %964 = vmatpush1.msra.mxu0 0.0
    %965 = vmatprep.subr.mxu0 0.0
    %966 = vmatpush1.msra.mxu0 0.0
    %967 = vmatprep.subr.mxu0 0.0
    %968 = vmatpush1.msra.mxu0 0.0
    %969 = vmatprep.subr.mxu0 0.0
    %970 = vmatpush1.msra.mxu0 0.0
    %971 = vmatprep.subr.mxu0 0.0
    %972 = vmatpush1.msra.mxu0 0.0
    %973 = vmatprep.subr.mxu0 0.0
    %974 = vmatpush1.msra.mxu0 0.0
    %975 = vmatprep.subr.mxu0 0.0
    %976 = vmatpush1.msra.mxu0 0.0
    %977 = vmatprep.subr.mxu0 0.0
    %978 = vmatpush1.msra.mxu0 0.0
    %979 = vmatprep.subr.mxu0 0.0
    %980 = vmatpush1.msra.mxu0 0.0
    %981 = vmatprep.subr.mxu0 0.0
    %982 = vmatpush1.msra.mxu0 0.0
    %983 = vmatprep.subr.mxu0 0.0
    %984 = vmatpush1.msra.mxu0 0.0
    %985 = vmatprep.subr.mxu0 0.0
    %986 = vmatpush1.msra.mxu0 0.0
    %987 = vmatprep.mubr.f32.mxu0 0.0
    %988 = vmatmul.mubr.f32.gmra.mrb[0].mxu0 %v921
    %v989 = vpop.f32.mrb[0].mxu0
    %v990 = vadd.f32 0.0, %v989
    %v991 = vpop.f32.mrb[0].mxu0
    %992 = vdwg.mxu0
    %v993 = vadd.f32 %v333, %v990
    %v994 = vtanh.pop %v993
    %v995 = vmul.f32 %v994, 0.5
    %v996 = vadd.f32 %v995, 0.5
    %v997 = vmul.f32 %v996, %v911
    %999 = vrot.lane.b32.xlu0 %v994, 64
    %v1000 = vpop.permute.xlu0 %999
    %v1002 = vmul.f32 %v996, %v1000
    %1004 = vrot.lane.b32.xlu0 %v1002, 32
    %v1005 = vpop.permute.xlu0 %1004
    %v1007 = vadd.f32 %v997, %v1005
    %v1008 = vtanh.pop %v1007
    %1010 = vrot.lane.b32.xlu0 %v1008, 64
    %v1011 = vpop.permute.xlu0 %1010
    %v1013 = vmul.f32 %v996, %v1011
    %1015 = vrot.lane.b32.xlu0 %v1013, 32
    %v1016 = vpop.permute.xlu0 %1015
    %v1017 = vsel %vm343, %v1016, 0
    %1019 = vmatprep.subr.mxu0 0.0
    %1020 = vmatpush1.msra.mxu0 %v339
    %1021 = vmatprep.subr.mxu0 0.0
    %1022 = vmatpush1.msra.mxu0 %v340
    %1023 = vmatprep.subr.mxu0 0.0
    %1024 = vmatpush1.msra.mxu0 %v341
    %1025 = vmatprep.subr.mxu0 0.0
    %1026 = vmatpush1.msra.mxu0 %v342
    %1027 = vmatprep.subr.mxu0 0.0
    %1028 = vmatpush1.msra.mxu0 0.0
    %1029 = vmatprep.subr.mxu0 0.0
    %1030 = vmatpush1.msra.mxu0 0.0
    %1031 = vmatprep.subr.mxu0 0.0
    %1032 = vmatpush1.msra.mxu0 0.0
    %1033 = vmatprep.subr.mxu0 0.0
    %1034 = vmatpush1.msra.mxu0 0.0
    %1035 = vmatprep.subr.mxu0 0.0
    %1036 = vmatpush1.msra.mxu0 0.0
    %1037 = vmatprep.subr.mxu0 0.0
    %1038 = vmatpush1.msra.mxu0 0.0
    %1039 = vmatprep.subr.mxu0 0.0
    %1040 = vmatpush1.msra.mxu0 0.0
    %1041 = vmatprep.subr.mxu0 0.0
    %1042 = vmatpush1.msra.mxu0 0.0
    %1043 = vmatprep.subr.mxu0 0.0
    %1044 = vmatpush1.msra.mxu0 0.0
    %1045 = vmatprep.subr.mxu0 0.0
    %1046 = vmatpush1.msra.mxu0 0.0
    %1047 = vmatprep.subr.mxu0 0.0
    %1048 = vmatpush1.msra.mxu0 0.0
    %1049 = vmatprep.subr.mxu0 0.0
    %1050 = vmatpush1.msra.mxu0 0.0
    %1051 = vmatprep.subr.mxu0 0.0
    %1052 = vmatpush1.msra.mxu0 0.0
    %1053 = vmatprep.subr.mxu0 0.0
    %1054 = vmatpush1.msra.mxu0 0.0
    %1055 = vmatprep.subr.mxu0 0.0
    %1056 = vmatpush1.msra.mxu0 0.0
    %1057 = vmatprep.subr.mxu0 0.0
    %1058 = vmatpush1.msra.mxu0 0.0
    %1059 = vmatprep.subr.mxu0 0.0
    %1060 = vmatpush1.msra.mxu0 0.0
    %1061 = vmatprep.subr.mxu0 0.0
    %1062 = vmatpush1.msra.mxu0 0.0
    %1063 = vmatprep.subr.mxu0 0.0
    %1064 = vmatpush1.msra.mxu0 0.0
    %1065 = vmatprep.subr.mxu0 0.0
    %1066 = vmatpush1.msra.mxu0 0.0
    %1067 = vmatprep.subr.mxu0 0.0
    %1068 = vmatpush1.msra.mxu0 0.0
    %1069 = vmatprep.subr.mxu0 0.0
    %1070 = vmatpush1.msra.mxu0 0.0
    %1071 = vmatprep.subr.mxu0 0.0
    %1072 = vmatpush1.msra.mxu0 0.0
    %1073 = vmatprep.subr.mxu0 0.0
    %1074 = vmatpush1.msra.mxu0 0.0
    %1075 = vmatprep.subr.mxu0 0.0
    %1076 = vmatpush1.msra.mxu0 0.0
    %1077 = vmatprep.subr.mxu0 0.0
    %1078 = vmatpush1.msra.mxu0 0.0
    %1079 = vmatprep.subr.mxu0 0.0
    %1080 = vmatpush1.msra.mxu0 0.0
    %1081 = vmatprep.subr.mxu0 0.0
    %1082 = vmatpush1.msra.mxu0 0.0
    %1083 = vmatprep.mubr.f32.mxu0 0.0
    %1084 = vmatmul.mubr.f32.gmra.mrb[0].mxu0 %v1017
    %v1085 = vpop.f32.mrb[0].mxu0
    %v1086 = vadd.f32 0.0, %v1085
    %v1087 = vpop.f32.mrb[0].mxu0
    %1088 = vdwg.mxu0
    %v1089 = vadd.f32 %v336, %v1086
    %v1090 = vtanh.pop %v1089
    %v1091 = vmul.f32 %v1090, 0.5
    %v1092 = vadd.f32 %v1091, 0.5
    %v1093 = vmul.f32 %v1092, %v1007
    %1095 = vrot.lane.b32.xlu0 %v1090, 64
    %v1096 = vpop.permute.xlu0 %1095
    %v1098 = vmul.f32 %v1092, %v1096
    %1100 = vrot.lane.b32.xlu0 %v1098, 32
    %v1101 = vpop.permute.xlu0 %1100
    %v1103 = vadd.f32 %v1093, %v1101
    %v1104 = vtanh.pop %v1103
    %1106 = vrot.lane.b32.xlu0 %v1104, 64
    %v1107 = vpop.permute.xlu0 %1106
    %v1109 = vmul.f32 %v1092, %v1107
    %1111 = vrot.lane.b32.xlu0 %v533, 64
    %v1112 = vpop.permute.xlu0 %1111
    %1114 = vrot.lane.b32.xlu0 %v629, 96
    %v1115 = vpop.permute.xlu0 %1114
    %1118 = vrot.lane.b32.xlu0 %v917, 64
    %v1119 = vpop.permute.xlu0 %1118
    %1121 = vrot.lane.b32.xlu0 %v1013, 96
    %v1122 = vpop.permute.xlu0 %1121
    %v1124 = vsel %vm343, %v440, %v1112
    %vm1125 = vcmask 523264
    %v1126 = vsel %vm1125, %v1124, %v1115
    %vm1127 = vcmask 785408
    %v1128 = vsel %vm1127, %v1126, %v725
    %v1129 = vsel %vm343, %v824, %v1119
    %v1130 = vsel %vm1125, %v1129, %v1122
    %v1131 = vsel %vm1127, %v1130, %v1109
    %v1132 = vpack.c.bf16 %v1128, %v1128
    %v1133 = vpack.c.bf16 %v1131, %v1131
    %s1134 = smul.u32 4, 32
    %s1135 = smul.u32 %s1134, 1
    %s1136 = sshll.u32 %s1135, 4
    %1137 = dma.done [#allocation3], %s1136
    %v1138 = vld [vmem:[#allocation2] sm:$0xff]
    %v1139 = vld [vmem:[#allocation2 + $0x8] sm:$0xff]
    %v1140 = vld [vmem:[#allocation2 + $0x10] sm:$0xff]
    %v1141 = vld [vmem:[#allocation2 + $0x18] sm:$0xff]
    %v1142 = vld [vmem:[#allocation2 + $0x20] sm:$0xff]
    %v1143 = vld [vmem:[#allocation2 + $0x28] sm:$0xff]
    %v1144 = vld [vmem:[#allocation2 + $0x30] sm:$0xff]
    %v1145 = vld [vmem:[#allocation2 + $0x38] sm:$0xff]
    %v1146 = vld [vmem:[#allocation2 + $0x40] sm:$0xff]
    %v1147 = vld [vmem:[#allocation2 + $0x48] sm:$0xff]
    %v1148 = vld [vmem:[#allocation2 + $0x50] sm:$0xff]
    %v1149 = vld [vmem:[#allocation2 + $0x58] sm:$0xff]
    %v1150 = vld [vmem:[#allocation2 + $0x60] sm:$0xff]
    %v1151 = vld [vmem:[#allocation2 + $0x68] sm:$0xff]
    %v1152 = vld [vmem:[#allocation2 + $0x70] sm:$0xff]
    %v1153 = vld [vmem:[#allocation2 + $0x78] sm:$0xff]
    %v1154 = vld [vmem:[%s4] sm:$0x1]
    %v1156 = vlaneseq
    %v1157 = vshrl.u32 %v1156, 7
    %v1158 = vsub.s32 0, %v1157
    %v1159 = vrot.slane %v1154, %v1158
    %1161 = vmatprep.subr.bf16.mxu0 0
    %1162 = vmatpush1.bf16.msra.mxu0 %v1138
    %1163 = vmatprep.subr.bf16.mxu0 0
    %1164 = vmatpush1.bf16.msra.mxu0 %v1139
    %1165 = vmatprep.subr.bf16.mxu0 0
    %1166 = vmatpush1.bf16.msra.mxu0 %v1140
    %1167 = vmatprep.subr.bf16.mxu0 0
    %1168 = vmatpush1.bf16.msra.mxu0 %v1141
    %1169 = vmatprep.subr.bf16.mxu0 0
    %1170 = vmatpush1.bf16.msra.mxu0 %v1142
    %1171 = vmatprep.subr.bf16.mxu0 0
    %1172 = vmatpush1.bf16.msra.mxu0 %v1143
    %1173 = vmatprep.subr.bf16.mxu0 0
    %1174 = vmatpush1.bf16.msra.mxu0 %v1144
    %1175 = vmatprep.subr.bf16.mxu0 0
    %1176 = vmatpush1.bf16.msra.mxu0 %v1145
    %1177 = vmatprep.subr.bf16.mxu0 0
    %1178 = vmatpush1.bf16.msra.mxu0 %v1146
    %1179 = vmatprep.subr.bf16.mxu0 0
    %1180 = vmatpush1.bf16.msra.mxu0 %v1147
    %1181 = vmatprep.subr.bf16.mxu0 0
    %1182 = vmatpush1.bf16.msra.mxu0 %v1148
    %1183 = vmatprep.subr.bf16.mxu0 0
    %1184 = vmatpush1.bf16.msra.mxu0 %v1149
    %1185 = vmatprep.subr.bf16.mxu0 0
    %1186 = vmatpush1.bf16.msra.mxu0 %v1150
    %1187 = vmatprep.subr.bf16.mxu0 0
    %1188 = vmatpush1.bf16.msra.mxu0 %v1151
    %1189 = vmatprep.subr.bf16.mxu0 0
    %1190 = vmatpush1.bf16.msra.mxu0 %v1152
    %1191 = vmatprep.subr.bf16.mxu0 0
    %1192 = vmatpush1.bf16.msra.mxu0 %v1153
    %1193 = vmatprep.mubr.bf16.mxu0 %v1133
    %1194 = vmatmul.mubr.bf16.gmra.mrb[0].mxu0 %v1132
    %v1195 = vpop.f32.mrb[0].mxu0
    %v1196 = vadd.f32 %v1159, %v1195
    %v1197 = vpop.f32.mrb[0].mxu0
    %v1198 = vpop.f32.mrb[0].mxu0
    %v1199 = vpop.f32.mrb[0].mxu0
    %1200 = vdwg.mxu0
    %v1201 = vmul.f32 %v1196, %v1196
    %1202 = vadd.xlane.f32.xlu0 %v1201
    %v1203 = vpop.xlane.xlu0 %1202
    %v1204 = vrsqrt.pop %v1203
    %v1205 = vmin.f32 %v1204, 1.0
    %v1206 = vmul.f32 %v1196, %v1205
    %1207 = vst [vmem:[#allocation7] sm:$0xff] %v1206
    // Predicated region
    $region30: #{tpu_custom_call.1} parent=1 // pred_check
      _
    $region31: #{tpu_custom_call.1} parent=1 // pred_check_branch
      %1209 = sbr.rel (0) target = $region33
    $region32: #{tpu_custom_call.1} parent=1 // pred_region
      %s1211 = ssub.s32 128, 128
      %1212 = vsyncadd [#allocation6], %s1211
      %s1214 = sshll.u32 [#allocation7], 4
      %s1215 = int_to_ptr.vmem [resolvable:$true] %s1214
      %1217 = dma.vmem_to_hbm [thread:$0]  %s1215, 128, %s6, [#allocation6]
    $region33: #{tpu_custom_call.1} parent=1 // pred_fallthru
      _
    // Predicated region
    $region34: #{tpu_custom_call.1} parent=1 // pred_check
      _
    $region35: #{tpu_custom_call.1} parent=1 // pred_check_branch
      %1219 = sbr.rel (0) target = $region37
    $region36: #{tpu_custom_call.1} parent=1 // pred_region
      %1220 = dma.done [#allocation6], 128
    $region37: #{tpu_custom_call.1} parent=1 // pred_fallthru
      _
    %1221 = vsyncpa [#allocation5], 1
    %1222 = vsyncpa [#allocation6], 1
  %1223 = vsyncmov [#allocation3]
  %s1224 = vpop.sfrf %1223
  %p1225 = scmp.eq.s32.totalorder %s1224, 0
  %p1226 = pneg %p1225
  %1228 = shalt.err (%p1226)

</llo_original>
